<compile_context>
chip_gen: v5e
topology: v5e:2x2
jax: 0.10.0
libtpu: 0.0.40
codegen_flags: <defaults>
</compile_context>

<pallas_src>
import jax
import jax.numpy as jnp
from jax import lax
from jax.experimental import pallas as pl
from jax.experimental.pallas import tpu as pltpu


def _round_up(x, m):
    return ((x + m - 1) // m) * m


def _gru_kernel(x_ref, len_ref, wih_ref, whh_ref, bi_ref, bh_ref, out_ref, h_scr):
    """One grid step = one chunk of Tc timesteps of the masked GRU recurrence."""
    c = pl.program_id(0)
    Tc, Bp, Hp = x_ref.shape
    compute_dtype = wih_ref.dtype

    @pl.when(c == 0)
    def _():
        h_scr[...] = jnp.zeros_like(h_scr)

    # hoisted once per chunk: per-row lengths broadcast to the full tile (int32, 1 vreg)
    lens_b = jnp.broadcast_to(len_ref[...], (Bp, Hp))

    def step(s, h):
        t = c * Tc + s                           # global timestep
        x = x_ref[s]                             # (Bp, Hp) compute_dtype
        # two fused gate matmuls on the MXU, f32 accumulation, biases added in f32
        gi = jnp.dot(x, wih_ref[...],
                     preferred_element_type=jnp.float32) + bi_ref[...]       # (Bp, 3Hp)
        gh = jnp.dot(h.astype(compute_dtype), whh_ref[...],
                     preferred_element_type=jnp.float32) + bh_ref[...]       # (Bp, 3Hp)
        r = jax.nn.sigmoid(gi[:, :Hp] + gh[:, :Hp])
        z = jax.nn.sigmoid(gi[:, Hp:2 * Hp] + gh[:, Hp:2 * Hp])
        n = jnp.tanh(gi[:, 2 * Hp:] + r * gh[:, 2 * Hp:])
        h_new = (1.0 - z) * n + z * h
        # packed-sequence semantics: freeze the hidden state once t >= lengths[b]
        return jnp.where(t < lens_b, h_new, h)

    h = lax.fori_loop(0, Tc, step, h_scr[...], unroll=True)
    h_scr[...] = h

    # single output store, only on the last grid step (output block is resident anyway)
    @pl.when(c == pl.num_programs(0) - 1)
    def _():
        out_ref[...] = h


def prepare_params(emb_table, w_ih, w_hh, b_ih, b_hh, *,
                   compute_dtype=jnp.bfloat16, lane=128):
    """Fuse PyTorch-layout GRU params into kernel layout.

    w_ih, w_hh: (3H, H) with gate order (r, z, n); b_ih, b_hh: (3H,).
    Returns (padded embedding table (V, Hp) compute_dtype,
             (W_ih (Hp,3Hp), W_hh (Hp,3Hp) compute_dtype, b_i (1,3Hp), b_h (1,3Hp) f32)).
    Padding with zeros keeps the padded hidden columns identically zero.
    """
    V, H = emb_table.shape
    Hp = _round_up(H, lane)

    def pack_w(w):
        gates = []
        for g in range(3):
            wg = w[g * H:(g + 1) * H].T                       # (H, H), so kernel does x @ W
            gates.append(jnp.pad(wg, ((0, Hp - H), (0, Hp - H))))
        return jnp.concatenate(gates, axis=1).astype(compute_dtype)   # (Hp, 3Hp)

    def pack_b(b):
        gates = [jnp.pad(b[g * H:(g + 1) * H], (0, Hp - H)) for g in range(3)]
        return jnp.concatenate(gates).reshape(1, 3 * Hp).astype(jnp.float32)

    emb_p = jnp.pad(emb_table, ((0, 0), (0, Hp - H))).astype(compute_dtype)
    fused = (pack_w(w_ih), pack_w(w_hh), pack_b(b_ih), pack_b(b_hh))
    return emb_p, fused


def packed_encoder_rnn_forward(tokens, emb_table_p, fused_params, hidden_size, *,
                               time_chunk=16):
    """tokens: (B, T) int32.  Returns (output (B,H) f32, hidden (1,B,H) f32)."""
    B, T = tokens.shape
    H = hidden_size
    wih, whh, bi, bh = fused_params
    Hp = wih.shape[0]

    # lengths[b] = last nonzero token index + 1 (pack_padded_sequence lengths)
    idx = jnp.arange(T, dtype=jnp.int32)
    lengths = (jnp.max(jnp.where(tokens != 0, idx, -1), axis=1) + 1).astype(jnp.int32)

    # embedding lookup (plain-JAX gather), time-major (T, B, Hp), compute dtype
    x = jnp.transpose(emb_table_p[tokens], (1, 0, 2))

    # pad batch to a sublane multiple and time to a chunk multiple; padded rows/steps are
    # masked out by the in-kernel length check (padded rows get length 0).
    Bp = _round_up(B, 8)
    Tc = min(time_chunk, T)
    Tp = _round_up(T, Tc)
    x = jnp.pad(x, ((0, Tp - T), (0, Bp - B), (0, 0)))
    lens = jnp.pad(lengths, (0, Bp - B)).reshape(Bp, 1)

    # whole-array, single-buffered VMEM residents (no per-step DMA, no double buffering)
    vmem_resident = pl.BlockSpec(memory_space=pltpu.MemorySpace.VMEM)

    out = pl.pallas_call(
        _gru_kernel,
        out_shape=jax.ShapeDtypeStruct((Bp, Hp), jnp.float32),
        grid_spec=pltpu.PrefetchScalarGridSpec(
            num_scalar_prefetch=0,
            grid=(Tp // Tc,),
            in_specs=[
                pl.BlockSpec((Tc, Bp, Hp), lambda c: (c, 0, 0)),   # time-chunked activations
                vmem_resident,                                     # lengths (Bp, 1) int32
                vmem_resident, vmem_resident,                      # fused W_ih, W_hh (Hp, 3Hp)
                vmem_resident, vmem_resident,                      # fused b_ih, b_hh (1, 3Hp)
            ],
            out_specs=pl.BlockSpec((Bp, Hp), lambda c: (0, 0)),
            scratch_shapes=[pltpu.VMEM((Bp, Hp), jnp.float32)],    # recurrent hidden state
        ),
        compiler_params=pltpu.CompilerParams(
            dimension_semantics=("arbitrary",)),                    # time recurrence is serial
        # TODO(synk): for large production batches add a leading 'parallel' batch-tile grid
        # axis so v7x's second TensorCore runs an independent batch shard of the recurrence.
    )(x, lens, wih, whh, bi, bh)

    output = out[:B, :H]          # hidden gathered at t = lengths-1
    hidden = output[None]         # (1, B, H): final hidden (== output for 1-layer GRU)
    return output, hidden


def init_params(key, input_size, hidden_size):
    """PyTorch-style raw parameters (uniform(-1/sqrt(H), 1/sqrt(H)) for the GRU)."""
    H = hidden_size
    ks = jax.random.split(key, 5)
    bound = 1.0 / jnp.sqrt(jnp.float32(H))
    emb_table = jax.random.normal(ks[0], (input_size, H), jnp.float32)
    w_ih = jax.random.uniform(ks[1], (3 * H, H), jnp.float32, -bound, bound)
    w_hh = jax.random.uniform(ks[2], (3 * H, H), jnp.float32, -bound, bound)
    b_ih = jax.random.uniform(ks[3], (3 * H,), jnp.float32, -bound, bound)
    b_hh = jax.random.uniform(ks[4], (3 * H,), jnp.float32, -bound, bound)
    return emb_table, (w_ih, w_hh, b_ih, b_hh)


def _reference_forward(tokens, emb_table_p, fused_params, hidden_size):
    """Pure-JAX reference using the same fused (bf16) parameters."""
    wih, whh, bi, bh = [p.astype(jnp.float32) for p in fused_params]
    B, T = tokens.shape
    Hp = wih.shape[0]
    idx = jnp.arange(T, dtype=jnp.int32)
    lengths = jnp.max(jnp.where(tokens != 0, idx, -1), axis=1) + 1
    x = jnp.transpose(emb_table_p[tokens].astype(jnp.float32), (1, 0, 2))   # (T, B, Hp)
    h = jnp.zeros((B, Hp), jnp.float32)
    for t in range(T):
        gi = x[t] @ wih + bi
        gh = h @ whh + bh
        r = jax.nn.sigmoid(gi[:, :Hp] + gh[:, :Hp])
        z = jax.nn.sigmoid(gi[:, Hp:2 * Hp] + gh[:, Hp:2 * Hp])
        n = jnp.tanh(gi[:, 2 * Hp:] + r * gh[:, 2 * Hp:])
        h_new = (1.0 - z) * n + z * h
        h = jnp.where((t < lengths)[:, None], h_new, h)
    return h[:, :hidden_size]


if __name__ == "__main__":
    B, T = 2, 8
    INPUT_SIZE, HIDDEN = 50, 32

    key = jax.random.PRNGKey(0)
    k_tok, k_par = jax.random.split(key)

    # tokens in [1, vocab) then zero-padded tails -> different per-row lengths
    tokens = jax.random.randint(k_tok, (B, T), 1, INPUT_SIZE, dtype=jnp.int32)
    seq_lengths = jnp.array([5, 8], dtype=jnp.int32)
    pad_mask = jnp.arange(T, dtype=jnp.int32)[None, :] < seq_lengths[:, None]
    tokens = jnp.where(pad_mask, tokens, 0)

    emb_table, (w_ih, w_hh, b_ih, b_hh) = init_params(k_par, INPUT_SIZE, HIDDEN)
    emb_p, fused = prepare_params(emb_table, w_ih, w_hh, b_ih, b_hh)

    output, hidden = packed_encoder_rnn_forward(tokens, emb_p, fused, HIDDEN, time_chunk=8)
    jax.block_until_ready((output, hidden))

    assert output.shape == (B, HIDDEN)
    assert hidden.shape == (1, B, HIDDEN)

    ref = _reference_forward(tokens, emb_p, fused, HIDDEN)
    assert jnp.allclose(output, ref, atol=1e-2), float(jnp.max(jnp.abs(output - ref)))
    assert jnp.allclose(hidden[0], ref, atol=1e-2)

    print("KERNEL_OK")
</pallas_src>

<mosaic_0001>
module attributes {stable_mosaic.version = 11 : i64} {
  func.func @_gru_kernel(%arg0: i32, %arg1: memref<8x8x128xbf16, #tpu.memory_space<vmem>>, %arg2: memref<8x1xi32, #tpu.memory_space<vmem>>, %arg3: memref<128x384xbf16, #tpu.memory_space<vmem>>, %arg4: memref<128x384xbf16, #tpu.memory_space<vmem>>, %arg5: memref<1x384xf32, #tpu.memory_space<vmem>>, %arg6: memref<1x384xf32, #tpu.memory_space<vmem>>, %arg7: memref<8x128xf32, #tpu.memory_space<vmem>>, %arg8: memref<8x128xf32, #tpu.memory_space<vmem>>) attributes {dimension_semantics = [#tpu.dimension_semantics<arbitrary>], iteration_bounds = array<i64: 1>, scalar_prefetch = 0 : i64, scratch_operands = 1 : i64, tpu.core_type = #tpu.core_type<tc>, window_params = [{transform_indices = @transform_0, window_bounds = array<i64: 8, 8, 128>}, {pipeline_mode = #tpu.pipeline_mode<synchronous>, transform_indices = @transform_1, window_bounds = array<i64: 8, 1>}, {pipeline_mode = #tpu.pipeline_mode<synchronous>, transform_indices = @transform_2, window_bounds = array<i64: 128, 384>}, {pipeline_mode = #tpu.pipeline_mode<synchronous>, transform_indices = @transform_3, window_bounds = array<i64: 128, 384>}, {pipeline_mode = #tpu.pipeline_mode<synchronous>, transform_indices = @transform_4, window_bounds = array<i64: 1, 384>}, {pipeline_mode = #tpu.pipeline_mode<synchronous>, transform_indices = @transform_5, window_bounds = array<i64: 1, 384>}, {pipeline_mode = #tpu.pipeline_mode<synchronous>, transform_indices = @transform_6, window_bounds = array<i64: 8, 128>}]} {
    %c0_i32 = arith.constant 0 : i32
    %0 = arith.cmpi eq, %arg0, %c0_i32 : i32
    %1 = arith.extui %0 : i1 to i32
    %c0_i32_0 = arith.constant 0 : i32
    %2 = arith.cmpi ne, %1, %c0_i32_0 : i32
    scf.if %2 {
      %cst_136 = arith.constant 0.000000e+00 : f32
      %371 = vector.broadcast %cst_136 : f32 to vector<8x128xf32>
      %c0_137 = arith.constant 0 : index
      %c0_138 = arith.constant 0 : index
      %372 = vector.load %arg8[%c0_137, %c0_138] : memref<8x128xf32, #tpu.memory_space<vmem>>, vector<8x128xf32>
      tpu.vector_store %arg8[%c0_137, %c0_138], %371 {strides = array<i32>} : memref<8x128xf32, #tpu.memory_space<vmem>>, vector<8x128xf32>,
    } else {
    }
    %c0 = arith.constant 0 : index
    %c0_1 = arith.constant 0 : index
    %3 = vector.load %arg2[%c0, %c0_1] : memref<8x1xi32, #tpu.memory_space<vmem>>, vector<8x1xi32>
    %4 = vector.shape_cast %3 : vector<8x1xi32> to vector<8x1xi32>
    %5 = vector.broadcast %4 : vector<8x1xi32> to vector<8x128xi32>
    %c0_2 = arith.constant 0 : index
    %c0_3 = arith.constant 0 : index
    %6 = vector.load %arg8[%c0_2, %c0_3] : memref<8x128xf32, #tpu.memory_space<vmem>>, vector<8x128xf32>
    %c0_i32_4 = arith.constant 0 : i32
    %c8_i32 = arith.constant 8 : i32
    %7 = arith.muli %arg0, %c8_i32 : i32
    %8 = arith.addi %7, %c0_i32_4 : i32
    %9 = arith.index_cast %c0_i32_4 : i32 to index
    %c0_5 = arith.constant 0 : index
    %c0_6 = arith.constant 0 : index
    %10 = vector.load %arg1[%9, %c0_5, %c0_6] : memref<8x8x128xbf16, #tpu.memory_space<vmem>>, vector<1x8x128xbf16>
    %11 = vector.shape_cast %10 : vector<1x8x128xbf16> to vector<8x128xbf16>
    %c0_7 = arith.constant 0 : index
    %c0_8 = arith.constant 0 : index
    %12 = vector.load %arg3[%c0_7, %c0_8] : memref<128x384xbf16, #tpu.memory_space<vmem>>, vector<128x384xbf16>
    %cst = arith.constant dense<0.000000e+00> : vector<8x384xf32>
    %13 = tpu.matmul %11, %12, %cst {dimension_numbers = #tpu.dot_dimension_numbers<[1], [0], [0], [1], [0, 0, 1, 1], [], []>} : vector<8x128xbf16>, vector<128x384xbf16>, vector<8x384xf32> -> vector<8x384xf32>
    %c0_9 = arith.constant 0 : index
    %c0_10 = arith.constant 0 : index
    %14 = vector.load %arg5[%c0_9, %c0_10] : memref<1x384xf32, #tpu.memory_space<vmem>>, vector<1x384xf32>
    %15 = vector.broadcast %14 : vector<1x384xf32> to vector<8x384xf32>
    %16 = arith.addf %13, %15 : vector<8x384xf32>
    %17 = arith.truncf %6 : vector<8x128xf32> to vector<8x128xbf16>
    %c0_11 = arith.constant 0 : index
    %c0_12 = arith.constant 0 : index
    %18 = vector.load %arg4[%c0_11, %c0_12] : memref<128x384xbf16, #tpu.memory_space<vmem>>, vector<128x384xbf16>
    %cst_13 = arith.constant dense<0.000000e+00> : vector<8x384xf32>
    %19 = tpu.matmul %17, %18, %cst_13 {dimension_numbers = #tpu.dot_dimension_numbers<[1], [0], [0], [1], [0, 0, 1, 1], [], []>} : vector<8x128xbf16>, vector<128x384xbf16>, vector<8x384xf32> -> vector<8x384xf32>
    %c0_14 = arith.constant 0 : index
    %c0_15 = arith.constant 0 : index
    %20 = vector.load %arg6[%c0_14, %c0_15] : memref<1x384xf32, #tpu.memory_space<vmem>>, vector<1x384xf32>
    %21 = vector.broadcast %20 : vector<1x384xf32> to vector<8x384xf32>
    %22 = arith.addf %19, %21 : vector<8x384xf32>
    %23 = vector.extract_strided_slice %16 {offsets = [0, 0], sizes = [8, 128], strides = [1, 1]} : vector<8x384xf32> to vector<8x128xf32>
    %24 = vector.extract_strided_slice %22 {offsets = [0, 0], sizes = [8, 128], strides = [1, 1]} : vector<8x384xf32> to vector<8x128xf32>
    %25 = arith.addf %23, %24 : vector<8x128xf32>
    %26 = arith.negf %25 : vector<8x128xf32>
    %27 = math.exp %26 : vector<8x128xf32>
    %cst_16 = arith.constant 1.000000e+00 : f32
    %28 = vector.broadcast %cst_16 : f32 to vector<8x128xf32>
    %29 = arith.addf %28, %27 : vector<8x128xf32>
    %30 = arith.divf %28, %29 : vector<8x128xf32>
    %31 = vector.extract_strided_slice %16 {offsets = [0, 128], sizes = [8, 128], strides = [1, 1]} : vector<8x384xf32> to vector<8x128xf32>
    %32 = vector.extract_strided_slice %22 {offsets = [0, 128], sizes = [8, 128], strides = [1, 1]} : vector<8x384xf32> to vector<8x128xf32>
    %33 = arith.addf %31, %32 : vector<8x128xf32>
    %34 = arith.negf %33 : vector<8x128xf32>
    %35 = math.exp %34 : vector<8x128xf32>
    %cst_17 = arith.constant 1.000000e+00 : f32
    %36 = vector.broadcast %cst_17 : f32 to vector<8x128xf32>
    %37 = arith.addf %36, %35 : vector<8x128xf32>
    %38 = arith.divf %36, %37 : vector<8x128xf32>
    %39 = vector.extract_strided_slice %16 {offsets = [0, 256], sizes = [8, 128], strides = [1, 1]} : vector<8x384xf32> to vector<8x128xf32>
    %40 = vector.extract_strided_slice %22 {offsets = [0, 256], sizes = [8, 128], strides = [1, 1]} : vector<8x384xf32> to vector<8x128xf32>
    %41 = arith.mulf %30, %40 : vector<8x128xf32>
    %42 = arith.addf %39, %41 : vector<8x128xf32>
    %43 = math.tanh %42 : vector<8x128xf32>
    %cst_18 = arith.constant 1.000000e+00 : f32
    %44 = vector.broadcast %cst_18 : f32 to vector<8x128xf32>
    %45 = arith.subf %44, %38 : vector<8x128xf32>
    %46 = arith.mulf %45, %43 : vector<8x128xf32>
    %47 = arith.mulf %38, %6 : vector<8x128xf32>
    %48 = arith.addf %46, %47 : vector<8x128xf32>
    %49 = vector.broadcast %8 : i32 to vector<8x128xi32>
    %50 = arith.cmpi slt, %49, %5 : vector<8x128xi32>
    %51 = arith.select %50, %48, %6 : vector<8x128xi1>, vector<8x128xf32>
    %c1_i32 = arith.constant 1 : i32
    %c8_i32_19 = arith.constant 8 : i32
    %52 = arith.muli %arg0, %c8_i32_19 : i32
    %53 = arith.addi %52, %c1_i32 : i32
    %54 = arith.index_cast %c1_i32 : i32 to index
    %c0_20 = arith.constant 0 : index
    %c0_21 = arith.constant 0 : index
    %55 = vector.load %arg1[%54, %c0_20, %c0_21] : memref<8x8x128xbf16, #tpu.memory_space<vmem>>, vector<1x8x128xbf16>
    %56 = vector.shape_cast %55 : vector<1x8x128xbf16> to vector<8x128xbf16>
    %c0_22 = arith.constant 0 : index
    %c0_23 = arith.constant 0 : index
    %57 = vector.load %arg3[%c0_22, %c0_23] : memref<128x384xbf16, #tpu.memory_space<vmem>>, vector<128x384xbf16>
    %cst_24 = arith.constant dense<0.000000e+00> : vector<8x384xf32>
    %58 = tpu.matmul %56, %57, %cst_24 {dimension_numbers = #tpu.dot_dimension_numbers<[1], [0], [0], [1], [0, 0, 1, 1], [], []>} : vector<8x128xbf16>, vector<128x384xbf16>, vector<8x384xf32> -> vector<8x384xf32>
    %c0_25 = arith.constant 0 : index
    %c0_26 = arith.constant 0 : index
    %59 = vector.load %arg5[%c0_25, %c0_26] : memref<1x384xf32, #tpu.memory_space<vmem>>, vector<1x384xf32>
    %60 = vector.broadcast %59 : vector<1x384xf32> to vector<8x384xf32>
    %61 = arith.addf %58, %60 : vector<8x384xf32>
    %62 = arith.truncf %51 : vector<8x128xf32> to vector<8x128xbf16>
    %c0_27 = arith.constant 0 : index
    %c0_28 = arith.constant 0 : index
    %63 = vector.load %arg4[%c0_27, %c0_28] : memref<128x384xbf16, #tpu.memory_space<vmem>>, vector<128x384xbf16>
    %cst_29 = arith.constant dense<0.000000e+00> : vector<8x384xf32>
    %64 = tpu.matmul %62, %63, %cst_29 {dimension_numbers = #tpu.dot_dimension_numbers<[1], [0], [0], [1], [0, 0, 1, 1], [], []>} : vector<8x128xbf16>, vector<128x384xbf16>, vector<8x384xf32> -> vector<8x384xf32>
    %c0_30 = arith.constant 0 : index
    %c0_31 = arith.constant 0 : index
    %65 = vector.load %arg6[%c0_30, %c0_31] : memref<1x384xf32, #tpu.memory_space<vmem>>, vector<1x384xf32>
    %66 = vector.broadcast %65 : vector<1x384xf32> to vector<8x384xf32>
    %67 = arith.addf %64, %66 : vector<8x384xf32>
    %68 = vector.extract_strided_slice %61 {offsets = [0, 0], sizes = [8, 128], strides = [1, 1]} : vector<8x384xf32> to vector<8x128xf32>
    %69 = vector.extract_strided_slice %67 {offsets = [0, 0], sizes = [8, 128], strides = [1, 1]} : vector<8x384xf32> to vector<8x128xf32>
    %70 = arith.addf %68, %69 : vector<8x128xf32>
    %71 = arith.negf %70 : vector<8x128xf32>
    %72 = math.exp %71 : vector<8x128xf32>
    %cst_32 = arith.constant 1.000000e+00 : f32
    %73 = vector.broadcast %cst_32 : f32 to vector<8x128xf32>
    %74 = arith.addf %73, %72 : vector<8x128xf32>
    %75 = arith.divf %73, %74 : vector<8x128xf32>
    %76 = vector.extract_strided_slice %61 {offsets = [0, 128], sizes = [8, 128], strides = [1, 1]} : vector<8x384xf32> to vector<8x128xf32>
    %77 = vector.extract_strided_slice %67 {offsets = [0, 128], sizes = [8, 128], strides = [1, 1]} : vector<8x384xf32> to vector<8x128xf32>
    %78 = arith.addf %76, %77 : vector<8x128xf32>
    %79 = arith.negf %78 : vector<8x128xf32>
    %80 = math.exp %79 : vector<8x128xf32>
    %cst_33 = arith.constant 1.000000e+00 : f32
    %81 = vector.broadcast %cst_33 : f32 to vector<8x128xf32>
    %82 = arith.addf %81, %80 : vector<8x128xf32>
    %83 = arith.divf %81, %82 : vector<8x128xf32>
    %84 = vector.extract_strided_slice %61 {offsets = [0, 256], sizes = [8, 128], strides = [1, 1]} : vector<8x384xf32> to vector<8x128xf32>
    %85 = vector.extract_strided_slice %67 {offsets = [0, 256], sizes = [8, 128], strides = [1, 1]} : vector<8x384xf32> to vector<8x128xf32>
    %86 = arith.mulf %75, %85 : vector<8x128xf32>
    %87 = arith.addf %84, %86 : vector<8x128xf32>
    %88 = math.tanh %87 : vector<8x128xf32>
    %cst_34 = arith.constant 1.000000e+00 : f32
    %89 = vector.broadcast %cst_34 : f32 to vector<8x128xf32>
    %90 = arith.subf %89, %83 : vector<8x128xf32>
    %91 = arith.mulf %90, %88 : vector<8x128xf32>
    %92 = arith.mulf %83, %51 : vector<8x128xf32>
    %93 = arith.addf %91, %92 : vector<8x128xf32>
    %94 = vector.broadcast %53 : i32 to vector<8x128xi32>
    %95 = arith.cmpi slt, %94, %5 : vector<8x128xi32>
    %96 = arith.select %95, %93, %51 : vector<8x128xi1>, vector<8x128xf32>
    %c2_i32 = arith.constant 2 : i32
    %c8_i32_35 = arith.constant 8 : i32
    %97 = arith.muli %arg0, %c8_i32_35 : i32
    %98 = arith.addi %97, %c2_i32 : i32
    %99 = arith.index_cast %c2_i32 : i32 to index
    %c0_36 = arith.constant 0 : index
    %c0_37 = arith.constant 0 : index
    %100 = vector.load %arg1[%99, %c0_36, %c0_37] : memref<8x8x128xbf16, #tpu.memory_space<vmem>>, vector<1x8x128xbf16>
    %101 = vector.shape_cast %100 : vector<1x8x128xbf16> to vector<8x128xbf16>
    %c0_38 = arith.constant 0 : index
    %c0_39 = arith.constant 0 : index
    %102 = vector.load %arg3[%c0_38, %c0_39] : memref<128x384xbf16, #tpu.memory_space<vmem>>, vector<128x384xbf16>
    %cst_40 = arith.constant dense<0.000000e+00> : vector<8x384xf32>
    %103 = tpu.matmul %101, %102, %cst_40 {dimension_numbers = #tpu.dot_dimension_numbers<[1], [0], [0], [1], [0, 0, 1, 1], [], []>} : vector<8x128xbf16>, vector<128x384xbf16>, vector<8x384xf32> -> vector<8x384xf32>
    %c0_41 = arith.constant 0 : index
    %c0_42 = arith.constant 0 : index
    %104 = vector.load %arg5[%c0_41, %c0_42] : memref<1x384xf32, #tpu.memory_space<vmem>>, vector<1x384xf32>
    %105 = vector.broadcast %104 : vector<1x384xf32> to vector<8x384xf32>
    %106 = arith.addf %103, %105 : vector<8x384xf32>
    %107 = arith.truncf %96 : vector<8x128xf32> to vector<8x128xbf16>
    %c0_43 = arith.constant 0 : index
    %c0_44 = arith.constant 0 : index
    %108 = vector.load %arg4[%c0_43, %c0_44] : memref<128x384xbf16, #tpu.memory_space<vmem>>, vector<128x384xbf16>
    %cst_45 = arith.constant dense<0.000000e+00> : vector<8x384xf32>
    %109 = tpu.matmul %107, %108, %cst_45 {dimension_numbers = #tpu.dot_dimension_numbers<[1], [0], [0], [1], [0, 0, 1, 1], [], []>} : vector<8x128xbf16>, vector<128x384xbf16>, vector<8x384xf32> -> vector<8x384xf32>
    %c0_46 = arith.constant 0 : index
    %c0_47 = arith.constant 0 : index
    %110 = vector.load %arg6[%c0_46, %c0_47] : memref<1x384xf32, #tpu.memory_space<vmem>>, vector<1x384xf32>
    %111 = vector.broadcast %110 : vector<1x384xf32> to vector<8x384xf32>
    %112 = arith.addf %109, %111 : vector<8x384xf32>
    %113 = vector.extract_strided_slice %106 {offsets = [0, 0], sizes = [8, 128], strides = [1, 1]} : vector<8x384xf32> to vector<8x128xf32>
    %114 = vector.extract_strided_slice %112 {offsets = [0, 0], sizes = [8, 128], strides = [1, 1]} : vector<8x384xf32> to vector<8x128xf32>
    %115 = arith.addf %113, %114 : vector<8x128xf32>
    %116 = arith.negf %115 : vector<8x128xf32>
    %117 = math.exp %116 : vector<8x128xf32>
    %cst_48 = arith.constant 1.000000e+00 : f32
    %118 = vector.broadcast %cst_48 : f32 to vector<8x128xf32>
    %119 = arith.addf %118, %117 : vector<8x128xf32>
    %120 = arith.divf %118, %119 : vector<8x128xf32>
    %121 = vector.extract_strided_slice %106 {offsets = [0, 128], sizes = [8, 128], strides = [1, 1]} : vector<8x384xf32> to vector<8x128xf32>
    %122 = vector.extract_strided_slice %112 {offsets = [0, 128], sizes = [8, 128], strides = [1, 1]} : vector<8x384xf32> to vector<8x128xf32>
    %123 = arith.addf %121, %122 : vector<8x128xf32>
    %124 = arith.negf %123 : vector<8x128xf32>
    %125 = math.exp %124 : vector<8x128xf32>
    %cst_49 = arith.constant 1.000000e+00 : f32
    %126 = vector.broadcast %cst_49 : f32 to vector<8x128xf32>
    %127 = arith.addf %126, %125 : vector<8x128xf32>
    %128 = arith.divf %126, %127 : vector<8x128xf32>
    %129 = vector.extract_strided_slice %106 {offsets = [0, 256], sizes = [8, 128], strides = [1, 1]} : vector<8x384xf32> to vector<8x128xf32>
    %130 = vector.extract_strided_slice %112 {offsets = [0, 256], sizes = [8, 128], strides = [1, 1]} : vector<8x384xf32> to vector<8x128xf32>
    %131 = arith.mulf %120, %130 : vector<8x128xf32>
    %132 = arith.addf %129, %131 : vector<8x128xf32>
    %133 = math.tanh %132 : vector<8x128xf32>
    %cst_50 = arith.constant 1.000000e+00 : f32
    %134 = vector.broadcast %cst_50 : f32 to vector<8x128xf32>
    %135 = arith.subf %134, %128 : vector<8x128xf32>
    %136 = arith.mulf %135, %133 : vector<8x128xf32>
    %137 = arith.mulf %128, %96 : vector<8x128xf32>
    %138 = arith.addf %136, %137 : vector<8x128xf32>
    %139 = vector.broadcast %98 : i32 to vector<8x128xi32>
    %140 = arith.cmpi slt, %139, %5 : vector<8x128xi32>
    %141 = arith.select %140, %138, %96 : vector<8x128xi1>, vector<8x128xf32>
    %c3_i32 = arith.constant 3 : i32
    %c8_i32_51 = arith.constant 8 : i32
    %142 = arith.muli %arg0, %c8_i32_51 : i32
    %143 = arith.addi %142, %c3_i32 : i32
    %144 = arith.index_cast %c3_i32 : i32 to index
    %c0_52 = arith.constant 0 : index
    %c0_53 = arith.constant 0 : index
    %145 = vector.load %arg1[%144, %c0_52, %c0_53] : memref<8x8x128xbf16, #tpu.memory_space<vmem>>, vector<1x8x128xbf16>
    %146 = vector.shape_cast %145 : vector<1x8x128xbf16> to vector<8x128xbf16>
    %c0_54 = arith.constant 0 : index
    %c0_55 = arith.constant 0 : index
    %147 = vector.load %arg3[%c0_54, %c0_55] : memref<128x384xbf16, #tpu.memory_space<vmem>>, vector<128x384xbf16>
    %cst_56 = arith.constant dense<0.000000e+00> : vector<8x384xf32>
    %148 = tpu.matmul %146, %147, %cst_56 {dimension_numbers = #tpu.dot_dimension_numbers<[1], [0], [0], [1], [0, 0, 1, 1], [], []>} : vector<8x128xbf16>, vector<128x384xbf16>, vector<8x384xf32> -> vector<8x384xf32>
    %c0_57 = arith.constant 0 : index
    %c0_58 = arith.constant 0 : index
    %149 = vector.load %arg5[%c0_57, %c0_58] : memref<1x384xf32, #tpu.memory_space<vmem>>, vector<1x384xf32>
    %150 = vector.broadcast %149 : vector<1x384xf32> to vector<8x384xf32>
    %151 = arith.addf %148, %150 : vector<8x384xf32>
    %152 = arith.truncf %141 : vector<8x128xf32> to vector<8x128xbf16>
    %c0_59 = arith.constant 0 : index
    %c0_60 = arith.constant 0 : index
    %153 = vector.load %arg4[%c0_59, %c0_60] : memref<128x384xbf16, #tpu.memory_space<vmem>>, vector<128x384xbf16>
    %cst_61 = arith.constant dense<0.000000e+00> : vector<8x384xf32>
    %154 = tpu.matmul %152, %153, %cst_61 {dimension_numbers = #tpu.dot_dimension_numbers<[1], [0], [0], [1], [0, 0, 1, 1], [], []>} : vector<8x128xbf16>, vector<128x384xbf16>, vector<8x384xf32> -> vector<8x384xf32>
    %c0_62 = arith.constant 0 : index
    %c0_63 = arith.constant 0 : index
    %155 = vector.load %arg6[%c0_62, %c0_63] : memref<1x384xf32, #tpu.memory_space<vmem>>, vector<1x384xf32>
    %156 = vector.broadcast %155 : vector<1x384xf32> to vector<8x384xf32>
    %157 = arith.addf %154, %156 : vector<8x384xf32>
    %158 = vector.extract_strided_slice %151 {offsets = [0, 0], sizes = [8, 128], strides = [1, 1]} : vector<8x384xf32> to vector<8x128xf32>
    %159 = vector.extract_strided_slice %157 {offsets = [0, 0], sizes = [8, 128], strides = [1, 1]} : vector<8x384xf32> to vector<8x128xf32>
    %160 = arith.addf %158, %159 : vector<8x128xf32>
    %161 = arith.negf %160 : vector<8x128xf32>
    %162 = math.exp %161 : vector<8x128xf32>
    %cst_64 = arith.constant 1.000000e+00 : f32
    %163 = vector.broadcast %cst_64 : f32 to vector<8x128xf32>
    %164 = arith.addf %163, %162 : vector<8x128xf32>
    %165 = arith.divf %163, %164 : vector<8x128xf32>
    %166 = vector.extract_strided_slice %151 {offsets = [0, 128], sizes = [8, 128], strides = [1, 1]} : vector<8x384xf32> to vector<8x128xf32>
    %167 = vector.extract_strided_slice %157 {offsets = [0, 128], sizes = [8, 128], strides = [1, 1]} : vector<8x384xf32> to vector<8x128xf32>
    %168 = arith.addf %166, %167 : vector<8x128xf32>
    %169 = arith.negf %168 : vector<8x128xf32>
    %170 = math.exp %169 : vector<8x128xf32>
    %cst_65 = arith.constant 1.000000e+00 : f32
    %171 = vector.broadcast %cst_65 : f32 to vector<8x128xf32>
    %172 = arith.addf %171, %170 : vector<8x128xf32>
    %173 = arith.divf %171, %172 : vector<8x128xf32>
    %174 = vector.extract_strided_slice %151 {offsets = [0, 256], sizes = [8, 128], strides = [1, 1]} : vector<8x384xf32> to vector<8x128xf32>
    %175 = vector.extract_strided_slice %157 {offsets = [0, 256], sizes = [8, 128], strides = [1, 1]} : vector<8x384xf32> to vector<8x128xf32>
    %176 = arith.mulf %165, %175 : vector<8x128xf32>
    %177 = arith.addf %174, %176 : vector<8x128xf32>
    %178 = math.tanh %177 : vector<8x128xf32>
    %cst_66 = arith.constant 1.000000e+00 : f32
    %179 = vector.broadcast %cst_66 : f32 to vector<8x128xf32>
    %180 = arith.subf %179, %173 : vector<8x128xf32>
    %181 = arith.mulf %180, %178 : vector<8x128xf32>
    %182 = arith.mulf %173, %141 : vector<8x128xf32>
    %183 = arith.addf %181, %182 : vector<8x128xf32>
    %184 = vector.broadcast %143 : i32 to vector<8x128xi32>
    %185 = arith.cmpi slt, %184, %5 : vector<8x128xi32>
    %186 = arith.select %185, %183, %141 : vector<8x128xi1>, vector<8x128xf32>
    %c4_i32 = arith.constant 4 : i32
    %c8_i32_67 = arith.constant 8 : i32
    %187 = arith.muli %arg0, %c8_i32_67 : i32
    %188 = arith.addi %187, %c4_i32 : i32
    %189 = arith.index_cast %c4_i32 : i32 to index
    %c0_68 = arith.constant 0 : index
    %c0_69 = arith.constant 0 : index
    %190 = vector.load %arg1[%189, %c0_68, %c0_69] : memref<8x8x128xbf16, #tpu.memory_space<vmem>>, vector<1x8x128xbf16>
    %191 = vector.shape_cast %190 : vector<1x8x128xbf16> to vector<8x128xbf16>
    %c0_70 = arith.constant 0 : index
    %c0_71 = arith.constant 0 : index
    %192 = vector.load %arg3[%c0_70, %c0_71] : memref<128x384xbf16, #tpu.memory_space<vmem>>, vector<128x384xbf16>
    %cst_72 = arith.constant dense<0.000000e+00> : vector<8x384xf32>
    %193 = tpu.matmul %191, %192, %cst_72 {dimension_numbers = #tpu.dot_dimension_numbers<[1], [0], [0], [1], [0, 0, 1, 1], [], []>} : vector<8x128xbf16>, vector<128x384xbf16>, vector<8x384xf32> -> vector<8x384xf32>
    %c0_73 = arith.constant 0 : index
    %c0_74 = arith.constant 0 : index
    %194 = vector.load %arg5[%c0_73, %c0_74] : memref<1x384xf32, #tpu.memory_space<vmem>>, vector<1x384xf32>
    %195 = vector.broadcast %194 : vector<1x384xf32> to vector<8x384xf32>
    %196 = arith.addf %193, %195 : vector<8x384xf32>
    %197 = arith.truncf %186 : vector<8x128xf32> to vector<8x128xbf16>
    %c0_75 = arith.constant 0 : index
    %c0_76 = arith.constant 0 : index
    %198 = vector.load %arg4[%c0_75, %c0_76] : memref<128x384xbf16, #tpu.memory_space<vmem>>, vector<128x384xbf16>
    %cst_77 = arith.constant dense<0.000000e+00> : vector<8x384xf32>
    %199 = tpu.matmul %197, %198, %cst_77 {dimension_numbers = #tpu.dot_dimension_numbers<[1], [0], [0], [1], [0, 0, 1, 1], [], []>} : vector<8x128xbf16>, vector<128x384xbf16>, vector<8x384xf32> -> vector<8x384xf32>
    %c0_78 = arith.constant 0 : index
    %c0_79 = arith.constant 0 : index
    %200 = vector.load %arg6[%c0_78, %c0_79] : memref<1x384xf32, #tpu.memory_space<vmem>>, vector<1x384xf32>
    %201 = vector.broadcast %200 : vector<1x384xf32> to vector<8x384xf32>
    %202 = arith.addf %199, %201 : vector<8x384xf32>
    %203 = vector.extract_strided_slice %196 {offsets = [0, 0], sizes = [8, 128], strides = [1, 1]} : vector<8x384xf32> to vector<8x128xf32>
    %204 = vector.extract_strided_slice %202 {offsets = [0, 0], sizes = [8, 128], strides = [1, 1]} : vector<8x384xf32> to vector<8x128xf32>
    %205 = arith.addf %203, %204 : vector<8x128xf32>
    %206 = arith.negf %205 : vector<8x128xf32>
    %207 = math.exp %206 : vector<8x128xf32>
    %cst_80 = arith.constant 1.000000e+00 : f32
    %208 = vector.broadcast %cst_80 : f32 to vector<8x128xf32>
    %209 = arith.addf %208, %207 : vector<8x128xf32>
    %210 = arith.divf %208, %209 : vector<8x128xf32>
    %211 = vector.extract_strided_slice %196 {offsets = [0, 128], sizes = [8, 128], strides = [1, 1]} : vector<8x384xf32> to vector<8x128xf32>
    %212 = vector.extract_strided_slice %202 {offsets = [0, 128], sizes = [8, 128], strides = [1, 1]} : vector<8x384xf32> to vector<8x128xf32>
    %213 = arith.addf %211, %212 : vector<8x128xf32>
    %214 = arith.negf %213 : vector<8x128xf32>
    %215 = math.exp %214 : vector<8x128xf32>
    %cst_81 = arith.constant 1.000000e+00 : f32
    %216 = vector.broadcast %cst_81 : f32 to vector<8x128xf32>
    %217 = arith.addf %216, %215 : vector<8x128xf32>
    %218 = arith.divf %216, %217 : vector<8x128xf32>
    %219 = vector.extract_strided_slice %196 {offsets = [0, 256], sizes = [8, 128], strides = [1, 1]} : vector<8x384xf32> to vector<8x128xf32>
    %220 = vector.extract_strided_slice %202 {offsets = [0, 256], sizes = [8, 128], strides = [1, 1]} : vector<8x384xf32> to vector<8x128xf32>
    %221 = arith.mulf %210, %220 : vector<8x128xf32>
    %222 = arith.addf %219, %221 : vector<8x128xf32>
    %223 = math.tanh %222 : vector<8x128xf32>
    %cst_82 = arith.constant 1.000000e+00 : f32
    %224 = vector.broadcast %cst_82 : f32 to vector<8x128xf32>
    %225 = arith.subf %224, %218 : vector<8x128xf32>
    %226 = arith.mulf %225, %223 : vector<8x128xf32>
    %227 = arith.mulf %218, %186 : vector<8x128xf32>
    %228 = arith.addf %226, %227 : vector<8x128xf32>
    %229 = vector.broadcast %188 : i32 to vector<8x128xi32>
    %230 = arith.cmpi slt, %229, %5 : vector<8x128xi32>
    %231 = arith.select %230, %228, %186 : vector<8x128xi1>, vector<8x128xf32>
    %c5_i32 = arith.constant 5 : i32
    %c8_i32_83 = arith.constant 8 : i32
    %232 = arith.muli %arg0, %c8_i32_83 : i32
    %233 = arith.addi %232, %c5_i32 : i32
    %234 = arith.index_cast %c5_i32 : i32 to index
    %c0_84 = arith.constant 0 : index
    %c0_85 = arith.constant 0 : index
    %235 = vector.load %arg1[%234, %c0_84, %c0_85] : memref<8x8x128xbf16, #tpu.memory_space<vmem>>, vector<1x8x128xbf16>
    %236 = vector.shape_cast %235 : vector<1x8x128xbf16> to vector<8x128xbf16>
    %c0_86 = arith.constant 0 : index
    %c0_87 = arith.constant 0 : index
    %237 = vector.load %arg3[%c0_86, %c0_87] : memref<128x384xbf16, #tpu.memory_space<vmem>>, vector<128x384xbf16>
    %cst_88 = arith.constant dense<0.000000e+00> : vector<8x384xf32>
    %238 = tpu.matmul %236, %237, %cst_88 {dimension_numbers = #tpu.dot_dimension_numbers<[1], [0], [0], [1], [0, 0, 1, 1], [], []>} : vector<8x128xbf16>, vector<128x384xbf16>, vector<8x384xf32> -> vector<8x384xf32>
    %c0_89 = arith.constant 0 : index
    %c0_90 = arith.constant 0 : index
    %239 = vector.load %arg5[%c0_89, %c0_90] : memref<1x384xf32, #tpu.memory_space<vmem>>, vector<1x384xf32>
    %240 = vector.broadcast %239 : vector<1x384xf32> to vector<8x384xf32>
    %241 = arith.addf %238, %240 : vector<8x384xf32>
    %242 = arith.truncf %231 : vector<8x128xf32> to vector<8x128xbf16>
    %c0_91 = arith.constant 0 : index
    %c0_92 = arith.constant 0 : index
    %243 = vector.load %arg4[%c0_91, %c0_92] : memref<128x384xbf16, #tpu.memory_space<vmem>>, vector<128x384xbf16>
    %cst_93 = arith.constant dense<0.000000e+00> : vector<8x384xf32>
    %244 = tpu.matmul %242, %243, %cst_93 {dimension_numbers = #tpu.dot_dimension_numbers<[1], [0], [0], [1], [0, 0, 1, 1], [], []>} : vector<8x128xbf16>, vector<128x384xbf16>, vector<8x384xf32> -> vector<8x384xf32>
    %c0_94 = arith.constant 0 : index
    %c0_95 = arith.constant 0 : index
    %245 = vector.load %arg6[%c0_94, %c0_95] : memref<1x384xf32, #tpu.memory_space<vmem>>, vector<1x384xf32>
    %246 = vector.broadcast %245 : vector<1x384xf32> to vector<8x384xf32>
    %247 = arith.addf %244, %246 : vector<8x384xf32>
    %248 = vector.extract_strided_slice %241 {offsets = [0, 0], sizes = [8, 128], strides = [1, 1]} : vector<8x384xf32> to vector<8x128xf32>
    %249 = vector.extract_strided_slice %247 {offsets = [0, 0], sizes = [8, 128], strides = [1, 1]} : vector<8x384xf32> to vector<8x128xf32>
    %250 = arith.addf %248, %249 : vector<8x128xf32>
    %251 = arith.negf %250 : vector<8x128xf32>
    %252 = math.exp %251 : vector<8x128xf32>
    %cst_96 = arith.constant 1.000000e+00 : f32
    %253 = vector.broadcast %cst_96 : f32 to vector<8x128xf32>
    %254 = arith.addf %253, %252 : vector<8x128xf32>
    %255 = arith.divf %253, %254 : vector<8x128xf32>
    %256 = vector.extract_strided_slice %241 {offsets = [0, 128], sizes = [8, 128], strides = [1, 1]} : vector<8x384xf32> to vector<8x128xf32>
    %257 = vector.extract_strided_slice %247 {offsets = [0, 128], sizes = [8, 128], strides = [1, 1]} : vector<8x384xf32> to vector<8x128xf32>
    %258 = arith.addf %256, %257 : vector<8x128xf32>
    %259 = arith.negf %258 : vector<8x128xf32>
    %260 = math.exp %259 : vector<8x128xf32>
    %cst_97 = arith.constant 1.000000e+00 : f32
    %261 = vector.broadcast %cst_97 : f32 to vector<8x128xf32>
    %262 = arith.addf %261, %260 : vector<8x128xf32>
    %263 = arith.divf %261, %262 : vector<8x128xf32>
    %264 = vector.extract_strided_slice %241 {offsets = [0, 256], sizes = [8, 128], strides = [1, 1]} : vector<8x384xf32> to vector<8x128xf32>
    %265 = vector.extract_strided_slice %247 {offsets = [0, 256], sizes = [8, 128], strides = [1, 1]} : vector<8x384xf32> to vector<8x128xf32>
    %266 = arith.mulf %255, %265 : vector<8x128xf32>
    %267 = arith.addf %264, %266 : vector<8x128xf32>
    %268 = math.tanh %267 : vector<8x128xf32>
    %cst_98 = arith.constant 1.000000e+00 : f32
    %269 = vector.broadcast %cst_98 : f32 to vector<8x128xf32>
    %270 = arith.subf %269, %263 : vector<8x128xf32>
    %271 = arith.mulf %270, %268 : vector<8x128xf32>
    %272 = arith.mulf %263, %231 : vector<8x128xf32>
    %273 = arith.addf %271, %272 : vector<8x128xf32>
    %274 = vector.broadcast %233 : i32 to vector<8x128xi32>
    %275 = arith.cmpi slt, %274, %5 : vector<8x128xi32>
    %276 = arith.select %275, %273, %231 : vector<8x128xi1>, vector<8x128xf32>
    %c6_i32 = arith.constant 6 : i32
    %c8_i32_99 = arith.constant 8 : i32
    %277 = arith.muli %arg0, %c8_i32_99 : i32
    %278 = arith.addi %277, %c6_i32 : i32
    %279 = arith.index_cast %c6_i32 : i32 to index
    %c0_100 = arith.constant 0 : index
    %c0_101 = arith.constant 0 : index
    %280 = vector.load %arg1[%279, %c0_100, %c0_101] : memref<8x8x128xbf16, #tpu.memory_space<vmem>>, vector<1x8x128xbf16>
    %281 = vector.shape_cast %280 : vector<1x8x128xbf16> to vector<8x128xbf16>
    %c0_102 = arith.constant 0 : index
    %c0_103 = arith.constant 0 : index
    %282 = vector.load %arg3[%c0_102, %c0_103] : memref<128x384xbf16, #tpu.memory_space<vmem>>, vector<128x384xbf16>
    %cst_104 = arith.constant dense<0.000000e+00> : vector<8x384xf32>
    %283 = tpu.matmul %281, %282, %cst_104 {dimension_numbers = #tpu.dot_dimension_numbers<[1], [0], [0], [1], [0, 0, 1, 1], [], []>} : vector<8x128xbf16>, vector<128x384xbf16>, vector<8x384xf32> -> vector<8x384xf32>
    %c0_105 = arith.constant 0 : index
    %c0_106 = arith.constant 0 : index
    %284 = vector.load %arg5[%c0_105, %c0_106] : memref<1x384xf32, #tpu.memory_space<vmem>>, vector<1x384xf32>
    %285 = vector.broadcast %284 : vector<1x384xf32> to vector<8x384xf32>
    %286 = arith.addf %283, %285 : vector<8x384xf32>
    %287 = arith.truncf %276 : vector<8x128xf32> to vector<8x128xbf16>
    %c0_107 = arith.constant 0 : index
    %c0_108 = arith.constant 0 : index
    %288 = vector.load %arg4[%c0_107, %c0_108] : memref<128x384xbf16, #tpu.memory_space<vmem>>, vector<128x384xbf16>
    %cst_109 = arith.constant dense<0.000000e+00> : vector<8x384xf32>
    %289 = tpu.matmul %287, %288, %cst_109 {dimension_numbers = #tpu.dot_dimension_numbers<[1], [0], [0], [1], [0, 0, 1, 1], [], []>} : vector<8x128xbf16>, vector<128x384xbf16>, vector<8x384xf32> -> vector<8x384xf32>
    %c0_110 = arith.constant 0 : index
    %c0_111 = arith.constant 0 : index
    %290 = vector.load %arg6[%c0_110, %c0_111] : memref<1x384xf32, #tpu.memory_space<vmem>>, vector<1x384xf32>
    %291 = vector.broadcast %290 : vector<1x384xf32> to vector<8x384xf32>
    %292 = arith.addf %289, %291 : vector<8x384xf32>
    %293 = vector.extract_strided_slice %286 {offsets = [0, 0], sizes = [8, 128], strides = [1, 1]} : vector<8x384xf32> to vector<8x128xf32>
    %294 = vector.extract_strided_slice %292 {offsets = [0, 0], sizes = [8, 128], strides = [1, 1]} : vector<8x384xf32> to vector<8x128xf32>
    %295 = arith.addf %293, %294 : vector<8x128xf32>
    %296 = arith.negf %295 : vector<8x128xf32>
    %297 = math.exp %296 : vector<8x128xf32>
    %cst_112 = arith.constant 1.000000e+00 : f32
    %298 = vector.broadcast %cst_112 : f32 to vector<8x128xf32>
    %299 = arith.addf %298, %297 : vector<8x128xf32>
    %300 = arith.divf %298, %299 : vector<8x128xf32>
    %301 = vector.extract_strided_slice %286 {offsets = [0, 128], sizes = [8, 128], strides = [1, 1]} : vector<8x384xf32> to vector<8x128xf32>
    %302 = vector.extract_strided_slice %292 {offsets = [0, 128], sizes = [8, 128], strides = [1, 1]} : vector<8x384xf32> to vector<8x128xf32>
    %303 = arith.addf %301, %302 : vector<8x128xf32>
    %304 = arith.negf %303 : vector<8x128xf32>
    %305 = math.exp %304 : vector<8x128xf32>
    %cst_113 = arith.constant 1.000000e+00 : f32
    %306 = vector.broadcast %cst_113 : f32 to vector<8x128xf32>
    %307 = arith.addf %306, %305 : vector<8x128xf32>
    %308 = arith.divf %306, %307 : vector<8x128xf32>
    %309 = vector.extract_strided_slice %286 {offsets = [0, 256], sizes = [8, 128], strides = [1, 1]} : vector<8x384xf32> to vector<8x128xf32>
    %310 = vector.extract_strided_slice %292 {offsets = [0, 256], sizes = [8, 128], strides = [1, 1]} : vector<8x384xf32> to vector<8x128xf32>
    %311 = arith.mulf %300, %310 : vector<8x128xf32>
    %312 = arith.addf %309, %311 : vector<8x128xf32>
    %313 = math.tanh %312 : vector<8x128xf32>
    %cst_114 = arith.constant 1.000000e+00 : f32
    %314 = vector.broadcast %cst_114 : f32 to vector<8x128xf32>
    %315 = arith.subf %314, %308 : vector<8x128xf32>
    %316 = arith.mulf %315, %313 : vector<8x128xf32>
    %317 = arith.mulf %308, %276 : vector<8x128xf32>
    %318 = arith.addf %316, %317 : vector<8x128xf32>
    %319 = vector.broadcast %278 : i32 to vector<8x128xi32>
    %320 = arith.cmpi slt, %319, %5 : vector<8x128xi32>
    %321 = arith.select %320, %318, %276 : vector<8x128xi1>, vector<8x128xf32>
    %c7_i32 = arith.constant 7 : i32
    %c8_i32_115 = arith.constant 8 : i32
    %322 = arith.muli %arg0, %c8_i32_115 : i32
    %323 = arith.addi %322, %c7_i32 : i32
    %324 = arith.index_cast %c7_i32 : i32 to index
    %c0_116 = arith.constant 0 : index
    %c0_117 = arith.constant 0 : index
    %325 = vector.load %arg1[%324, %c0_116, %c0_117] : memref<8x8x128xbf16, #tpu.memory_space<vmem>>, vector<1x8x128xbf16>
    %326 = vector.shape_cast %325 : vector<1x8x128xbf16> to vector<8x128xbf16>
    %c0_118 = arith.constant 0 : index
    %c0_119 = arith.constant 0 : index
    %327 = vector.load %arg3[%c0_118, %c0_119] : memref<128x384xbf16, #tpu.memory_space<vmem>>, vector<128x384xbf16>
    %cst_120 = arith.constant dense<0.000000e+00> : vector<8x384xf32>
    %328 = tpu.matmul %326, %327, %cst_120 {dimension_numbers = #tpu.dot_dimension_numbers<[1], [0], [0], [1], [0, 0, 1, 1], [], []>} : vector<8x128xbf16>, vector<128x384xbf16>, vector<8x384xf32> -> vector<8x384xf32>
    %c0_121 = arith.constant 0 : index
    %c0_122 = arith.constant 0 : index
    %329 = vector.load %arg5[%c0_121, %c0_122] : memref<1x384xf32, #tpu.memory_space<vmem>>, vector<1x384xf32>
    %330 = vector.broadcast %329 : vector<1x384xf32> to vector<8x384xf32>
    %331 = arith.addf %328, %330 : vector<8x384xf32>
    %332 = arith.truncf %321 : vector<8x128xf32> to vector<8x128xbf16>
    %c0_123 = arith.constant 0 : index
    %c0_124 = arith.constant 0 : index
    %333 = vector.load %arg4[%c0_123, %c0_124] : memref<128x384xbf16, #tpu.memory_space<vmem>>, vector<128x384xbf16>
    %cst_125 = arith.constant dense<0.000000e+00> : vector<8x384xf32>
    %334 = tpu.matmul %332, %333, %cst_125 {dimension_numbers = #tpu.dot_dimension_numbers<[1], [0], [0], [1], [0, 0, 1, 1], [], []>} : vector<8x128xbf16>, vector<128x384xbf16>, vector<8x384xf32> -> vector<8x384xf32>
    %c0_126 = arith.constant 0 : index
    %c0_127 = arith.constant 0 : index
    %335 = vector.load %arg6[%c0_126, %c0_127] : memref<1x384xf32, #tpu.memory_space<vmem>>, vector<1x384xf32>
    %336 = vector.broadcast %335 : vector<1x384xf32> to vector<8x384xf32>
    %337 = arith.addf %334, %336 : vector<8x384xf32>
    %338 = vector.extract_strided_slice %331 {offsets = [0, 0], sizes = [8, 128], strides = [1, 1]} : vector<8x384xf32> to vector<8x128xf32>
    %339 = vector.extract_strided_slice %337 {offsets = [0, 0], sizes = [8, 128], strides = [1, 1]} : vector<8x384xf32> to vector<8x128xf32>
    %340 = arith.addf %338, %339 : vector<8x128xf32>
    %341 = arith.negf %340 : vector<8x128xf32>
    %342 = math.exp %341 : vector<8x128xf32>
    %cst_128 = arith.constant 1.000000e+00 : f32
    %343 = vector.broadcast %cst_128 : f32 to vector<8x128xf32>
    %344 = arith.addf %343, %342 : vector<8x128xf32>
    %345 = arith.divf %343, %344 : vector<8x128xf32>
    %346 = vector.extract_strided_slice %331 {offsets = [0, 128], sizes = [8, 128], strides = [1, 1]} : vector<8x384xf32> to vector<8x128xf32>
    %347 = vector.extract_strided_slice %337 {offsets = [0, 128], sizes = [8, 128], strides = [1, 1]} : vector<8x384xf32> to vector<8x128xf32>
    %348 = arith.addf %346, %347 : vector<8x128xf32>
    %349 = arith.negf %348 : vector<8x128xf32>
    %350 = math.exp %349 : vector<8x128xf32>
    %cst_129 = arith.constant 1.000000e+00 : f32
    %351 = vector.broadcast %cst_129 : f32 to vector<8x128xf32>
    %352 = arith.addf %351, %350 : vector<8x128xf32>
    %353 = arith.divf %351, %352 : vector<8x128xf32>
    %354 = vector.extract_strided_slice %331 {offsets = [0, 256], sizes = [8, 128], strides = [1, 1]} : vector<8x384xf32> to vector<8x128xf32>
    %355 = vector.extract_strided_slice %337 {offsets = [0, 256], sizes = [8, 128], strides = [1, 1]} : vector<8x384xf32> to vector<8x128xf32>
    %356 = arith.mulf %345, %355 : vector<8x128xf32>
    %357 = arith.addf %354, %356 : vector<8x128xf32>
    %358 = math.tanh %357 : vector<8x128xf32>
    %cst_130 = arith.constant 1.000000e+00 : f32
    %359 = vector.broadcast %cst_130 : f32 to vector<8x128xf32>
    %360 = arith.subf %359, %353 : vector<8x128xf32>
    %361 = arith.mulf %360, %358 : vector<8x128xf32>
    %362 = arith.mulf %353, %321 : vector<8x128xf32>
    %363 = arith.addf %361, %362 : vector<8x128xf32>
    %364 = vector.broadcast %323 : i32 to vector<8x128xi32>
    %365 = arith.cmpi slt, %364, %5 : vector<8x128xi32>
    %366 = arith.select %365, %363, %321 : vector<8x128xi1>, vector<8x128xf32>
    %c8_i32_131 = arith.constant 8 : i32
    %c0_132 = arith.constant 0 : index
    %c0_133 = arith.constant 0 : index
    %367 = vector.load %arg8[%c0_132, %c0_133] : memref<8x128xf32, #tpu.memory_space<vmem>>, vector<8x128xf32>
    tpu.vector_store %arg8[%c0_132, %c0_133], %366 {strides = array<i32>} : memref<8x128xf32, #tpu.memory_space<vmem>>, vector<8x128xf32>,
    %c0_i32_134 = arith.constant 0 : i32
    %368 = arith.cmpi eq, %arg0, %c0_i32_134 : i32
    %369 = arith.extui %368 : i1 to i32
    %c0_i32_135 = arith.constant 0 : i32
    %370 = arith.cmpi ne, %369, %c0_i32_135 : i32
    scf.if %370 {
      %c0_136 = arith.constant 0 : index
      %c0_137 = arith.constant 0 : index
      %371 = vector.load %arg7[%c0_136, %c0_137] : memref<8x128xf32, #tpu.memory_space<vmem>>, vector<8x128xf32>
      tpu.vector_store %arg7[%c0_136, %c0_137], %366 {strides = array<i32>} : memref<8x128xf32, #tpu.memory_space<vmem>>, vector<8x128xf32>,
    } else {
    }
    return
  }
  func.func @transform_0(%arg0: i32) -> (i32, i32, i32) {
    %c0_i32 = arith.constant 0 : i32
    %c0_i32_0 = arith.constant 0 : i32
    %c0_i32_1 = arith.constant 0 : i32
    return %arg0, %c0_i32, %c0_i32_0 : i32, i32, i32
  }
  func.func @transform_1(%arg0: i32) -> (i32, i32) {
    %c0_i32 = arith.constant 0 : i32
    %c0_i32_0 = arith.constant 0 : i32
    %c0_i32_1 = arith.constant 0 : i32
    return %c0_i32, %c0_i32_0 : i32, i32
  }
  func.func @transform_2(%arg0: i32) -> (i32, i32) {
    %c0_i32 = arith.constant 0 : i32
    %c0_i32_0 = arith.constant 0 : i32
    %c0_i32_1 = arith.constant 0 : i32
    return %c0_i32, %c0_i32_0 : i32, i32
  }
  func.func @transform_3(%arg0: i32) -> (i32, i32) {
    %c0_i32 = arith.constant 0 : i32
    %c0_i32_0 = arith.constant 0 : i32
    %c0_i32_1 = arith.constant 0 : i32
    return %c0_i32, %c0_i32_0 : i32, i32
  }
  func.func @transform_4(%arg0: i32) -> (i32, i32) {
    %c0_i32 = arith.constant 0 : i32
    %c0_i32_0 = arith.constant 0 : i32
    %c0_i32_1 = arith.constant 0 : i32
    return %c0_i32, %c0_i32_0 : i32, i32
  }
  func.func @transform_5(%arg0: i32) -> (i32, i32) {
    %c0_i32 = arith.constant 0 : i32
    %c0_i32_0 = arith.constant 0 : i32
    %c0_i32_1 = arith.constant 0 : i32
    return %c0_i32, %c0_i32_0 : i32, i32
  }
  func.func @transform_6(%arg0: i32) -> (i32, i32) {
    %c0_i32 = arith.constant 0 : i32
    %c0_i32_0 = arith.constant 0 : i32
    %c0_i32_1 = arith.constant 0 : i32
    return %c0_i32, %c0_i32_0 : i32, i32
  }
}

</mosaic_0001>

<llo_original>
// kernel: tpu_custom_call.1
$region0: #{tpu_custom_call.1}
  #allocation0 [shape = 'u32[]', space=smem, size = 0x4, offset = 0x4, fixed_abs, tag = 'smem constant byte address 0x4 - core index']
  #allocation1 [shape = 'u32[72,128]{1,0:T(1,128)}', space=vmem, size = 0x9000, scoped, tag = 'internal scratch']
  #allocation2 [shape = 'f32[8,128]{1,0:T(8,128)}', space=vmem, size = 0x1000, scoped, tag = 'scratch operand']
  %s0 = inlined_call_operand.hbm [shape: bf16[8,8,128], index: 0, kind: input, shape index: {}]
  %s1 = inlined_call_operand.vmem [shape: s32[8,1], index: 1, kind: input, shape index: {}]
  %s2 = inlined_call_operand.hbm [shape: bf16[128,384], index: 2, kind: input, shape index: {}]
  %s3 = inlined_call_operand.hbm [shape: bf16[128,384], index: 3, kind: input, shape index: {}]
  %s4 = inlined_call_operand.vmem [shape: f32[1,384], index: 4, kind: input, shape index: {}]
  %s5 = inlined_call_operand.vmem [shape: f32[1,384], index: 5, kind: input, shape index: {}]
  %s6 = inlined_call_operand.hbm [shape: f32[8,128], index: 6, kind: output, shape index: {}]
  %s7 = sld [smem:[#allocation0]]
  $region54: #{tpu_custom_call.1} parent=0
    _
  %s9 = ssub.s32 1, %s7
  %s10 = scalar_select 0, %s9, %s7
  $region1: #{tpu_custom_call.1} parent=0
    #allocation3 [shape = 'u8[16384]{0}', space=vmem, size = 0x4000, scoped, tag = 'input window, operand 0, single buffered']
    #allocation4 [shape = 's32[1]{0}', space=sflag, size = 0x4, scoped, tag = 'scoped memory for tpu_custom_call.1']
    #allocation5 [shape = 's32[1]{0}', space=sflag, size = 0x4, scoped, tag = 'scoped memory for tpu_custom_call.1']
    #allocation6 [shape = 'u8[98304]{0}', space=vmem, size = 0x18000, scoped, tag = 'input window, operand 2, single buffered']
    #allocation7 [shape = 's32[1]{0}', space=sflag, size = 0x4, scoped, tag = 'scoped memory for tpu_custom_call.1']
    #allocation8 [shape = 'u8[98304]{0}', space=vmem, size = 0x18000, scoped, tag = 'input window, operand 3, single buffered']
    #allocation9 [shape = 'u8[4096]{0}', space=vmem, size = 0x1000, scoped, tag = 'output window, operand 0, single buffered']
    %11 = vsyncpa [#allocation4], 0
    %12 = vsyncpa [#allocation7], 0
    %13 = vsyncpa [#allocation5], 0
    // Predicated region
    $region2: #{tpu_custom_call.1} parent=1 // pred_check
      _
    $region3: #{tpu_custom_call.1} parent=1 // pred_check_branch
      %15 = sbr.rel (0) target = $region5
    $region4: #{tpu_custom_call.1} parent=1 // pred_region
      %17 = vsyncadd [#allocation4], 0
      %s18 = sshll.u32 %s0, 4
      %s19 = int_to_ptr.hbm [resolvable:$true] %s18
      %s20 = sshll.u32 [#allocation3], 4
      %s21 = int_to_ptr.vmem [resolvable:$true] %s20
      %26 = dma.hbm_to_vmem [thread:$0]  %s19, 512, %s21, [#allocation4], 64, 64, 4
    $region5: #{tpu_custom_call.1} parent=1 // pred_fallthru
      _
    // Predicated region
    $region6: #{tpu_custom_call.1} parent=1 // pred_check
      _
    $region7: #{tpu_custom_call.1} parent=1 // pred_check_branch
      %28 = sbr.rel (0) target = $region9
    $region8: #{tpu_custom_call.1} parent=1 // pred_region
      _
    $region9: #{tpu_custom_call.1} parent=1 // pred_fallthru
      _
    // Predicated region
    $region10: #{tpu_custom_call.1} parent=1 // pred_check
      _
    $region11: #{tpu_custom_call.1} parent=1 // pred_check_branch
      %30 = sbr.rel (0) target = $region13
    $region12: #{tpu_custom_call.1} parent=1 // pred_region
      %32 = vsyncadd [#allocation7], 0
      %s33 = sshll.u32 %s2, 4
      %s34 = int_to_ptr.hbm [resolvable:$true] %s33
      %s35 = sshll.u32 [#allocation6], 4
      %s36 = int_to_ptr.vmem [resolvable:$true] %s35
      %41 = dma.hbm_to_vmem [thread:$0]  %s34, 3072, %s36, [#allocation7], 192, 192, 12
    $region13: #{tpu_custom_call.1} parent=1 // pred_fallthru
      _
    // Predicated region
    $region14: #{tpu_custom_call.1} parent=1 // pred_check
      _
    $region15: #{tpu_custom_call.1} parent=1 // pred_check_branch
      %43 = sbr.rel (0) target = $region17
    $region16: #{tpu_custom_call.1} parent=1 // pred_region
      %45 = vsyncadd [#allocation7], 0
      %s46 = sshll.u32 %s3, 4
      %s47 = int_to_ptr.hbm [resolvable:$true] %s46
      %s48 = sshll.u32 [#allocation8], 4
      %s49 = int_to_ptr.vmem [resolvable:$true] %s48
      %54 = dma.hbm_to_vmem [thread:$0]  %s47, 3072, %s49, [#allocation7], 192, 192, 12
    $region17: #{tpu_custom_call.1} parent=1 // pred_fallthru
      _
    // Predicated region
    $region18: #{tpu_custom_call.1} parent=1 // pred_check
      _
    $region19: #{tpu_custom_call.1} parent=1 // pred_check_branch
      %56 = sbr.rel (0) target = $region21
    $region20: #{tpu_custom_call.1} parent=1 // pred_region
      _
    $region21: #{tpu_custom_call.1} parent=1 // pred_fallthru
      _
    // Predicated region
    $region22: #{tpu_custom_call.1} parent=1 // pred_check
      _
    $region23: #{tpu_custom_call.1} parent=1 // pred_check_branch
      %58 = sbr.rel (0) target = $region25
    $region24: #{tpu_custom_call.1} parent=1 // pred_region
      _
    $region25: #{tpu_custom_call.1} parent=1 // pred_fallthru
      _
    // Predicated region
    $region26: #{tpu_custom_call.1} parent=1 // pred_check
      _
    $region27: #{tpu_custom_call.1} parent=1 // pred_check_branch
      %60 = sbr.rel (0) target = $region29
    $region28: #{tpu_custom_call.1} parent=1 // pred_region
      %62 = dma.done [#allocation4], 512
    $region29: #{tpu_custom_call.1} parent=1 // pred_fallthru
      _
    // Predicated region
    $region30: #{tpu_custom_call.1} parent=1 // pred_check
      _
    $region31: #{tpu_custom_call.1} parent=1 // pred_check_branch
      %64 = sbr.rel (0) target = $region33
    $region32: #{tpu_custom_call.1} parent=1 // pred_region
      %66 = dma.done [#allocation7], 3072
    $region33: #{tpu_custom_call.1} parent=1 // pred_fallthru
      _
    // Predicated region
    $region34: #{tpu_custom_call.1} parent=1 // pred_check
      _
    $region35: #{tpu_custom_call.1} parent=1 // pred_check_branch
      %68 = sbr.rel (0) target = $region37
    $region36: #{tpu_custom_call.1} parent=1 // pred_region
      %70 = dma.done [#allocation7], 3072
    $region37: #{tpu_custom_call.1} parent=1 // pred_fallthru
      _
    %p71 = scmp.eq.s32.totalorder 0, 0
    // Predicated region
    $region38: #{tpu_custom_call.1} parent=1 // pred_check
      %p72 = pneg %p71
    $region39: #{tpu_custom_call.1} parent=1 // pred_check_branch
      %74 = sbr.rel (%p72) target = $region41
    $region40: #{tpu_custom_call.1} parent=1 // pred_region
      %75 = vst [vmem:[#allocation2] sm:$0xff] 0.0
    $region41: #{tpu_custom_call.1} parent=1 // pred_fallthru
      _
    %v76 = vld [vmem:[%s1] sm:$0xff]
    %77 = vset.pattern.permute.xlu0 0
    %78 = vperm.xlu0 %77, %v76
    %v79 = vpop.permute.xlu0 %78
    %v80 = vld [vmem:[#allocation2] sm:$0xff]
    %s81 = smul.u32 0, 8
    %v82 = vld [vmem:[#allocation3] sm:$0xf]
    %v83 = vld [vmem:[#allocation6] sm:$0xff]
    %v84 = vld [vmem:[#allocation6 + $0x8] sm:$0xf]
    %v85 = vld [vmem:[#allocation6 + $0xc] sm:$0xff]
    %v86 = vld [vmem:[#allocation6 + $0x14] sm:$0xf]
    %v87 = vld [vmem:[#allocation6 + $0x18] sm:$0xff]
    %v88 = vld [vmem:[#allocation6 + $0x20] sm:$0xf]
    %v89 = vld [vmem:[#allocation6 + $0x24] sm:$0xff]
    %v90 = vld [vmem:[#allocation6 + $0x2c] sm:$0xf]
    %v91 = vld [vmem:[#allocation6 + $0x30] sm:$0xff]
    %v92 = vld [vmem:[#allocation6 + $0x38] sm:$0xf]
    %v93 = vld [vmem:[#allocation6 + $0x3c] sm:$0xff]
    %v94 = vld [vmem:[#allocation6 + $0x44] sm:$0xf]
    %v95 = vld [vmem:[#allocation6 + $0x48] sm:$0xff]
    %v96 = vld [vmem:[#allocation6 + $0x50] sm:$0xf]
    %v97 = vld [vmem:[#allocation6 + $0x54] sm:$0xff]
    %v98 = vld [vmem:[#allocation6 + $0x5c] sm:$0xf]
    %v99 = vld [vmem:[#allocation6 + $0x60] sm:$0xff]
    %v100 = vld [vmem:[#allocation6 + $0x68] sm:$0xf]
    %v101 = vld [vmem:[#allocation6 + $0x6c] sm:$0xff]
    %v102 = vld [vmem:[#allocation6 + $0x74] sm:$0xf]
    %v103 = vld [vmem:[#allocation6 + $0x78] sm:$0xff]
    %v104 = vld [vmem:[#allocation6 + $0x80] sm:$0xf]
    %v105 = vld [vmem:[#allocation6 + $0x84] sm:$0xff]
    %v106 = vld [vmem:[#allocation6 + $0x8c] sm:$0xf]
    %v107 = vld [vmem:[#allocation6 + $0x90] sm:$0xff]
    %v108 = vld [vmem:[#allocation6 + $0x98] sm:$0xf]
    %v109 = vld [vmem:[#allocation6 + $0x9c] sm:$0xff]
    %v110 = vld [vmem:[#allocation6 + $0xa4] sm:$0xf]
    %v111 = vld [vmem:[#allocation6 + $0xa8] sm:$0xff]
    %v112 = vld [vmem:[#allocation6 + $0xb0] sm:$0xf]
    %v113 = vld [vmem:[#allocation6 + $0xb4] sm:$0xff]
    %v114 = vld [vmem:[#allocation6 + $0xbc] sm:$0xf]
    %v115 = vld [vmem:[%s4] sm:$0x7]
    %v117 = vperm.slane %v115, 0
    %v118 = vperm.slane %v115, 1
    %v119 = vperm.slane %v115, 2
    %v155 = vunpack.c.l.b16 %v83
    %v156 = vunpack.c.h.b16 %v83
    %v157 = vunpack.c.l.b16 %v84
    %v158 = vunpack.c.l.b16 %v85
    %v159 = vunpack.c.h.b16 %v85
    %v160 = vunpack.c.l.b16 %v86
    %v161 = vunpack.c.l.b16 %v87
    %v162 = vunpack.c.h.b16 %v87
    %v163 = vunpack.c.l.b16 %v88
    %v164 = vunpack.c.l.b16 %v89
    %v165 = vunpack.c.h.b16 %v89
    %v166 = vunpack.c.l.b16 %v90
    %v167 = vunpack.c.l.b16 %v91
    %v168 = vunpack.c.h.b16 %v91
    %v169 = vunpack.c.l.b16 %v92
    %v170 = vunpack.c.l.b16 %v93
    %v171 = vunpack.c.h.b16 %v93
    %v172 = vunpack.c.l.b16 %v94
    %v173 = vunpack.c.l.b16 %v95
    %v174 = vunpack.c.h.b16 %v95
    %v175 = vunpack.c.l.b16 %v96
    %v176 = vunpack.c.l.b16 %v97
    %v177 = vunpack.c.h.b16 %v97
    %v178 = vunpack.c.l.b16 %v98
    %v179 = vunpack.c.l.b16 %v99
    %v180 = vunpack.c.h.b16 %v99
    %v181 = vunpack.c.l.b16 %v100
    %v182 = vunpack.c.l.b16 %v101
    %v183 = vunpack.c.h.b16 %v101
    %v184 = vunpack.c.l.b16 %v102
    %v185 = vunpack.c.l.b16 %v103
    %v186 = vunpack.c.h.b16 %v103
    %v187 = vunpack.c.l.b16 %v104
    %v188 = vunpack.c.l.b16 %v105
    %v189 = vunpack.c.h.b16 %v105
    %v190 = vunpack.c.l.b16 %v106
    %v191 = vunpack.c.l.b16 %v107
    %v192 = vunpack.c.h.b16 %v107
    %v193 = vunpack.c.l.b16 %v108
    %v194 = vunpack.c.l.b16 %v109
    %v195 = vunpack.c.h.b16 %v109
    %v196 = vunpack.c.l.b16 %v110
    %v197 = vunpack.c.l.b16 %v111
    %v198 = vunpack.c.h.b16 %v111
    %v199 = vunpack.c.l.b16 %v112
    %v200 = vunpack.c.l.b16 %v113
    %v201 = vunpack.c.h.b16 %v113
    %v202 = vunpack.c.l.b16 %v114
    %v203 = vpack.c.b16 %v158, %v155
    %v204 = vpack.c.b16 %v159, %v156
    %v205 = vpack.c.b16 %v160, %v157
    %v206 = vpack.c.b16 %v164, %v161
    %v207 = vpack.c.b16 %v165, %v162
    %v208 = vpack.c.b16 %v166, %v163
    %v209 = vpack.c.b16 %v170, %v167
    %v210 = vpack.c.b16 %v171, %v168
    %v211 = vpack.c.b16 %v172, %v169
    %v212 = vpack.c.b16 %v176, %v173
    %v213 = vpack.c.b16 %v177, %v174
    %v214 = vpack.c.b16 %v178, %v175
    %v215 = vpack.c.b16 %v182, %v179
    %v216 = vpack.c.b16 %v183, %v180
    %v217 = vpack.c.b16 %v184, %v181
    %v218 = vpack.c.b16 %v188, %v185
    %v219 = vpack.c.b16 %v189, %v186
    %v220 = vpack.c.b16 %v190, %v187
    %v221 = vpack.c.b16 %v194, %v191
    %v222 = vpack.c.b16 %v195, %v192
    %v223 = vpack.c.b16 %v196, %v193
    %v224 = vpack.c.b16 %v200, %v197
    %v225 = vpack.c.b16 %v201, %v198
    %v226 = vpack.c.b16 %v202, %v199
    %251 = vmatpush.bf16.msra.mxu0 %v224
    %252 = vmatpush.bf16.msra.mxu0 %v221
    %253 = vmatpush.bf16.msra.mxu0 %v218
    %254 = vmatpush.bf16.msra.mxu0 %v215
    %255 = vmatpush.bf16.msra.mxu0 %v212
    %256 = vmatpush.bf16.msra.mxu0 %v209
    %257 = vmatpush.bf16.msra.mxu0 %v206
    %258 = vmatpush.bf16.msra.mxu0 %v203
    %259 = vmatmul.bf16.gmra.mxu0 %v82
    %v260 = vpop.f32.mrf.mxu0
    %v261 = vadd.f32 %v117, %v260
    %v262 = vpop.f32.mrf.mxu0
    %263 = vdwg.mxu0
    %264 = vmatpush.bf16.msra.mxu0 %v225
    %265 = vmatpush.bf16.msra.mxu0 %v222
    %266 = vmatpush.bf16.msra.mxu0 %v219
    %267 = vmatpush.bf16.msra.mxu0 %v216
    %268 = vmatpush.bf16.msra.mxu0 %v213
    %269 = vmatpush.bf16.msra.mxu0 %v210
    %270 = vmatpush.bf16.msra.mxu0 %v207
    %271 = vmatpush.bf16.msra.mxu0 %v204
    %272 = vmatmul.bf16.gmra.mxu0 %v82
    %v273 = vpop.f32.mrf.mxu0
    %v274 = vadd.f32 %v118, %v273
    %v275 = vpop.f32.mrf.mxu0
    %276 = vdwg.mxu0
    %277 = vmatpush.bf16.msra.mxu0 %v226
    %278 = vmatpush.bf16.msra.mxu0 %v223
    %279 = vmatpush.bf16.msra.mxu0 %v220
    %280 = vmatpush.bf16.msra.mxu0 %v217
    %281 = vmatpush.bf16.msra.mxu0 %v214
    %282 = vmatpush.bf16.msra.mxu0 %v211
    %283 = vmatpush.bf16.msra.mxu0 %v208
    %284 = vmatpush.bf16.msra.mxu0 %v205
    %285 = vmatmul.bf16.gmra.mxu0 %v82
    %v286 = vpop.f32.mrf.mxu0
    %v287 = vadd.f32 %v119, %v286
    %v288 = vpop.f32.mrf.mxu0
    %289 = vdwg.mxu0
    %v290 = vpack.c.bf16 %v80, %v80
    %v291 = vld [vmem:[#allocation8] sm:$0xff]
    %v292 = vld [vmem:[#allocation8 + $0x8] sm:$0xf]
    %v293 = vld [vmem:[#allocation8 + $0xc] sm:$0xff]
    %v294 = vld [vmem:[#allocation8 + $0x14] sm:$0xf]
    %v295 = vld [vmem:[#allocation8 + $0x18] sm:$0xff]
    %v296 = vld [vmem:[#allocation8 + $0x20] sm:$0xf]
    %v297 = vld [vmem:[#allocation8 + $0x24] sm:$0xff]
    %v298 = vld [vmem:[#allocation8 + $0x2c] sm:$0xf]
    %v299 = vld [vmem:[#allocation8 + $0x30] sm:$0xff]
    %v300 = vld [vmem:[#allocation8 + $0x38] sm:$0xf]
    %v301 = vld [vmem:[#allocation8 + $0x3c] sm:$0xff]
    %v302 = vld [vmem:[#allocation8 + $0x44] sm:$0xf]
    %v303 = vld [vmem:[#allocation8 + $0x48] sm:$0xff]
    %v304 = vld [vmem:[#allocation8 + $0x50] sm:$0xf]
    %v305 = vld [vmem:[#allocation8 + $0x54] sm:$0xff]
    %v306 = vld [vmem:[#allocation8 + $0x5c] sm:$0xf]
    %v307 = vld [vmem:[#allocation8 + $0x60] sm:$0xff]
    %v308 = vld [vmem:[#allocation8 + $0x68] sm:$0xf]
    %v309 = vld [vmem:[#allocation8 + $0x6c] sm:$0xff]
    %v310 = vld [vmem:[#allocation8 + $0x74] sm:$0xf]
    %v311 = vld [vmem:[#allocation8 + $0x78] sm:$0xff]
    %v312 = vld [vmem:[#allocation8 + $0x80] sm:$0xf]
    %v313 = vld [vmem:[#allocation8 + $0x84] sm:$0xff]
    %v314 = vld [vmem:[#allocation8 + $0x8c] sm:$0xf]
    %v315 = vld [vmem:[#allocation8 + $0x90] sm:$0xff]
    %v316 = vld [vmem:[#allocation8 + $0x98] sm:$0xf]
    %v317 = vld [vmem:[#allocation8 + $0x9c] sm:$0xff]
    %v318 = vld [vmem:[#allocation8 + $0xa4] sm:$0xf]
    %v319 = vld [vmem:[#allocation8 + $0xa8] sm:$0xff]
    %v320 = vld [vmem:[#allocation8 + $0xb0] sm:$0xf]
    %v321 = vld [vmem:[#allocation8 + $0xb4] sm:$0xff]
    %v322 = vld [vmem:[#allocation8 + $0xbc] sm:$0xf]
    %v323 = vld [vmem:[%s5] sm:$0x7]
    %v325 = vperm.slane %v323, 0
    %v326 = vperm.slane %v323, 1
    %v327 = vperm.slane %v323, 2
    %v363 = vunpack.c.l.b16 %v291
    %v364 = vunpack.c.h.b16 %v291
    %v365 = vunpack.c.l.b16 %v292
    %v366 = vunpack.c.l.b16 %v293
    %v367 = vunpack.c.h.b16 %v293
    %v368 = vunpack.c.l.b16 %v294
    %v369 = vunpack.c.l.b16 %v295
    %v370 = vunpack.c.h.b16 %v295
    %v371 = vunpack.c.l.b16 %v296
    %v372 = vunpack.c.l.b16 %v297
    %v373 = vunpack.c.h.b16 %v297
    %v374 = vunpack.c.l.b16 %v298
    %v375 = vunpack.c.l.b16 %v299
    %v376 = vunpack.c.h.b16 %v299
    %v377 = vunpack.c.l.b16 %v300
    %v378 = vunpack.c.l.b16 %v301
    %v379 = vunpack.c.h.b16 %v301
    %v380 = vunpack.c.l.b16 %v302
    %v381 = vunpack.c.l.b16 %v303
    %v382 = vunpack.c.h.b16 %v303
    %v383 = vunpack.c.l.b16 %v304
    %v384 = vunpack.c.l.b16 %v305
    %v385 = vunpack.c.h.b16 %v305
    %v386 = vunpack.c.l.b16 %v306
    %v387 = vunpack.c.l.b16 %v307
    %v388 = vunpack.c.h.b16 %v307
    %v389 = vunpack.c.l.b16 %v308
    %v390 = vunpack.c.l.b16 %v309
    %v391 = vunpack.c.h.b16 %v309
    %v392 = vunpack.c.l.b16 %v310
    %v393 = vunpack.c.l.b16 %v311
    %v394 = vunpack.c.h.b16 %v311
    %v395 = vunpack.c.l.b16 %v312
    %v396 = vunpack.c.l.b16 %v313
    %v397 = vunpack.c.h.b16 %v313
    %v398 = vunpack.c.l.b16 %v314
    %v399 = vunpack.c.l.b16 %v315
    %v400 = vunpack.c.h.b16 %v315
    %v401 = vunpack.c.l.b16 %v316
    %v402 = vunpack.c.l.b16 %v317
    %v403 = vunpack.c.h.b16 %v317
    %v404 = vunpack.c.l.b16 %v318
    %v405 = vunpack.c.l.b16 %v319
    %v406 = vunpack.c.h.b16 %v319
    %v407 = vunpack.c.l.b16 %v320
    %v408 = vunpack.c.l.b16 %v321
    %v409 = vunpack.c.h.b16 %v321
    %v410 = vunpack.c.l.b16 %v322
    %v411 = vpack.c.b16 %v366, %v363
    %v412 = vpack.c.b16 %v367, %v364
    %v413 = vpack.c.b16 %v368, %v365
    %v414 = vpack.c.b16 %v372, %v369
    %v415 = vpack.c.b16 %v373, %v370
    %v416 = vpack.c.b16 %v374, %v371
    %v417 = vpack.c.b16 %v378, %v375
    %v418 = vpack.c.b16 %v379, %v376
    %v419 = vpack.c.b16 %v380, %v377
    %v420 = vpack.c.b16 %v384, %v381
    %v421 = vpack.c.b16 %v385, %v382
    %v422 = vpack.c.b16 %v386, %v383
    %v423 = vpack.c.b16 %v390, %v387
    %v424 = vpack.c.b16 %v391, %v388
    %v425 = vpack.c.b16 %v392, %v389
    %v426 = vpack.c.b16 %v396, %v393
    %v427 = vpack.c.b16 %v397, %v394
    %v428 = vpack.c.b16 %v398, %v395
    %v429 = vpack.c.b16 %v402, %v399
    %v430 = vpack.c.b16 %v403, %v400
    %v431 = vpack.c.b16 %v404, %v401
    %v432 = vpack.c.b16 %v408, %v405
    %v433 = vpack.c.b16 %v409, %v406
    %v434 = vpack.c.b16 %v410, %v407
    %459 = vmatpush.bf16.msra.mxu0 %v432
    %460 = vmatpush.bf16.msra.mxu0 %v429
    %461 = vmatpush.bf16.msra.mxu0 %v426
    %462 = vmatpush.bf16.msra.mxu0 %v423
    %463 = vmatpush.bf16.msra.mxu0 %v420
    %464 = vmatpush.bf16.msra.mxu0 %v417
    %465 = vmatpush.bf16.msra.mxu0 %v414
    %466 = vmatpush.bf16.msra.mxu0 %v411
    %467 = vmatmul.bf16.gmra.mxu0 %v290
    %v468 = vpop.f32.mrf.mxu0
    %v469 = vadd.f32 %v325, %v468
    %v470 = vpop.f32.mrf.mxu0
    %471 = vdwg.mxu0
    %472 = vmatpush.bf16.msra.mxu0 %v433
    %473 = vmatpush.bf16.msra.mxu0 %v430
    %474 = vmatpush.bf16.msra.mxu0 %v427
    %475 = vmatpush.bf16.msra.mxu0 %v424
    %476 = vmatpush.bf16.msra.mxu0 %v421
    %477 = vmatpush.bf16.msra.mxu0 %v418
    %478 = vmatpush.bf16.msra.mxu0 %v415
    %479 = vmatpush.bf16.msra.mxu0 %v412
    %480 = vmatmul.bf16.gmra.mxu0 %v290
    %v481 = vpop.f32.mrf.mxu0
    %v482 = vadd.f32 %v326, %v481
    %v483 = vpop.f32.mrf.mxu0
    %484 = vdwg.mxu0
    %485 = vmatpush.bf16.msra.mxu0 %v434
    %486 = vmatpush.bf16.msra.mxu0 %v431
    %487 = vmatpush.bf16.msra.mxu0 %v428
    %488 = vmatpush.bf16.msra.mxu0 %v425
    %489 = vmatpush.bf16.msra.mxu0 %v422
    %490 = vmatpush.bf16.msra.mxu0 %v419
    %491 = vmatpush.bf16.msra.mxu0 %v416
    %492 = vmatpush.bf16.msra.mxu0 %v413
    %493 = vmatmul.bf16.gmra.mxu0 %v290
    %v494 = vpop.f32.mrf.mxu0
    %v495 = vadd.f32 %v327, %v494
    %v496 = vpop.f32.mrf.mxu0
    %497 = vdwg.mxu0
    %v498 = vadd.f32 %v261, %v469
    %v499 = vxor.u32 %v498, 2147483648
    %v500 = vmul.f32 %v499, 1.442695
    %v501 = vpow.pop %v500
    %v502 = vadd.f32 %v501, 1.0
    %v503 = vrcp.pop %v502
    %v504 = vmul.f32 %v502, %v503
    %v505 = vsub.f32 1.0, %v504
    %v506 = vmul.f32 %v503, %v505
    %v507 = vadd.f32 %v503, %v506
    %vm508 = vweird.f32 %v502
    %vm509 = vweird.f32 %v503
    %vm510 = vmor %vm508, %vm509
    %v511 = vsel %vm510, %v503, %v507
    %v512 = vand.u32 2147483647, %v502
    %vm513 = vcmp.eq.f32.partialorder %v512, 8.507059e+37
    %v514 = vand.u32 %v502, 2147483648
    %v515 = vor.u32 1.1754944e-38, %v514
    %v516 = vsel %vm513, %v515, %v511
    %v517 = vmul.f32 1.0, %v516
    %v518 = vadd.f32 %v274, %v482
    %v519 = vxor.u32 %v518, 2147483648
    %v520 = vmul.f32 %v519, 1.442695
    %v521 = vpow.pop %v520
    %v522 = vadd.f32 %v521, 1.0
    %v523 = vrcp.pop %v522
    %v524 = vmul.f32 %v522, %v523
    %v525 = vsub.f32 1.0, %v524
    %v526 = vmul.f32 %v523, %v525
    %v527 = vadd.f32 %v523, %v526
    %vm528 = vweird.f32 %v522
    %vm529 = vweird.f32 %v523
    %vm530 = vmor %vm528, %vm529
    %v531 = vsel %vm530, %v523, %v527
    %v532 = vand.u32 2147483647, %v522
    %vm533 = vcmp.eq.f32.partialorder %v532, 8.507059e+37
    %v534 = vand.u32 %v522, 2147483648
    %v535 = vor.u32 1.1754944e-38, %v534
    %v536 = vsel %vm533, %v535, %v531
    %v537 = vmul.f32 1.0, %v536
    %v538 = vmul.f32 %v517, %v495
    %v539 = vadd.f32 %v287, %v538
    %v540 = vtanh.pop %v539
    %v541 = vsub.f32 1.0, %v537
    %v542 = vmul.f32 %v541, %v540
    %v543 = vmul.f32 %v537, %v80
    %v544 = vadd.f32 %v542, %v543
    %v545 = vstv %s81
    %vm546 = vcmp.lt.s32.totalorder %v545, %v79
    %v547 = vsel %vm546, %v544, %v80
    %s548 = sadd.s32 %s81, 1
    %s549 = scalar_lea.vmem [#allocation3], 4
    %v550 = vld [vmem:[%s549] sm:$0xf]
    %551 = vmatpush.bf16.msra.mxu0 %v224
    %552 = vmatpush.bf16.msra.mxu0 %v221
    %553 = vmatpush.bf16.msra.mxu0 %v218
    %554 = vmatpush.bf16.msra.mxu0 %v215
    %555 = vmatpush.bf16.msra.mxu0 %v212
    %556 = vmatpush.bf16.msra.mxu0 %v209
    %557 = vmatpush.bf16.msra.mxu0 %v206
    %558 = vmatpush.bf16.msra.mxu0 %v203
    %559 = vmatmul.bf16.gmra.mxu0 %v550
    %v560 = vpop.f32.mrf.mxu0
    %v561 = vadd.f32 %v117, %v560
    %v562 = vpop.f32.mrf.mxu0
    %563 = vdwg.mxu0
    %564 = vmatpush.bf16.msra.mxu0 %v225
    %565 = vmatpush.bf16.msra.mxu0 %v222
    %566 = vmatpush.bf16.msra.mxu0 %v219
    %567 = vmatpush.bf16.msra.mxu0 %v216
    %568 = vmatpush.bf16.msra.mxu0 %v213
    %569 = vmatpush.bf16.msra.mxu0 %v210
    %570 = vmatpush.bf16.msra.mxu0 %v207
    %571 = vmatpush.bf16.msra.mxu0 %v204
    %572 = vmatmul.bf16.gmra.mxu0 %v550
    %v573 = vpop.f32.mrf.mxu0
    %v574 = vadd.f32 %v118, %v573
    %v575 = vpop.f32.mrf.mxu0
    %576 = vdwg.mxu0
    %577 = vmatpush.bf16.msra.mxu0 %v226
    %578 = vmatpush.bf16.msra.mxu0 %v223
    %579 = vmatpush.bf16.msra.mxu0 %v220
    %580 = vmatpush.bf16.msra.mxu0 %v217
    %581 = vmatpush.bf16.msra.mxu0 %v214
    %582 = vmatpush.bf16.msra.mxu0 %v211
    %583 = vmatpush.bf16.msra.mxu0 %v208
    %584 = vmatpush.bf16.msra.mxu0 %v205
    %585 = vmatmul.bf16.gmra.mxu0 %v550
    %v586 = vpop.f32.mrf.mxu0
    %v587 = vadd.f32 %v119, %v586
    %v588 = vpop.f32.mrf.mxu0
    %589 = vdwg.mxu0
    %v590 = vpack.c.bf16 %v547, %v547
    %591 = vmatpush.bf16.msra.mxu0 %v432
    %592 = vmatpush.bf16.msra.mxu0 %v429
    %593 = vmatpush.bf16.msra.mxu0 %v426
    %594 = vmatpush.bf16.msra.mxu0 %v423
    %595 = vmatpush.bf16.msra.mxu0 %v420
    %596 = vmatpush.bf16.msra.mxu0 %v417
    %597 = vmatpush.bf16.msra.mxu0 %v414
    %598 = vmatpush.bf16.msra.mxu0 %v411
    %599 = vmatmul.bf16.gmra.mxu0 %v590
    %v600 = vpop.f32.mrf.mxu0
    %v601 = vadd.f32 %v325, %v600
    %v602 = vpop.f32.mrf.mxu0
    %603 = vdwg.mxu0
    %604 = vmatpush.bf16.msra.mxu0 %v433
    %605 = vmatpush.bf16.msra.mxu0 %v430
    %606 = vmatpush.bf16.msra.mxu0 %v427
    %607 = vmatpush.bf16.msra.mxu0 %v424
    %608 = vmatpush.bf16.msra.mxu0 %v421
    %609 = vmatpush.bf16.msra.mxu0 %v418
    %610 = vmatpush.bf16.msra.mxu0 %v415
    %611 = vmatpush.bf16.msra.mxu0 %v412
    %612 = vmatmul.bf16.gmra.mxu0 %v590
    %v613 = vpop.f32.mrf.mxu0
    %v614 = vadd.f32 %v326, %v613
    %v615 = vpop.f32.mrf.mxu0
    %616 = vdwg.mxu0
    %617 = vmatpush.bf16.msra.mxu0 %v434
    %618 = vmatpush.bf16.msra.mxu0 %v431
    %619 = vmatpush.bf16.msra.mxu0 %v428
    %620 = vmatpush.bf16.msra.mxu0 %v425
    %621 = vmatpush.bf16.msra.mxu0 %v422
    %622 = vmatpush.bf16.msra.mxu0 %v419
    %623 = vmatpush.bf16.msra.mxu0 %v416
    %624 = vmatpush.bf16.msra.mxu0 %v413
    %625 = vmatmul.bf16.gmra.mxu0 %v590
    %v626 = vpop.f32.mrf.mxu0
    %v627 = vadd.f32 %v327, %v626
    %v628 = vpop.f32.mrf.mxu0
    %629 = vdwg.mxu0
    %v630 = vadd.f32 %v561, %v601
    %v631 = vxor.u32 %v630, 2147483648
    %v632 = vmul.f32 %v631, 1.442695
    %v633 = vpow.pop %v632
    %v634 = vadd.f32 %v633, 1.0
    %v635 = vrcp.pop %v634
    %v636 = vmul.f32 %v634, %v635
    %v637 = vsub.f32 1.0, %v636
    %v638 = vmul.f32 %v635, %v637
    %v639 = vadd.f32 %v635, %v638
    %vm640 = vweird.f32 %v634
    %vm641 = vweird.f32 %v635
    %vm642 = vmor %vm640, %vm641
    %v643 = vsel %vm642, %v635, %v639
    %v644 = vand.u32 2147483647, %v634
    %vm645 = vcmp.eq.f32.partialorder %v644, 8.507059e+37
    %v646 = vand.u32 %v634, 2147483648
    %v647 = vor.u32 1.1754944e-38, %v646
    %v648 = vsel %vm645, %v647, %v643
    %v649 = vmul.f32 1.0, %v648
    %v650 = vadd.f32 %v574, %v614
    %v651 = vxor.u32 %v650, 2147483648
    %v652 = vmul.f32 %v651, 1.442695
    %v653 = vpow.pop %v652
    %v654 = vadd.f32 %v653, 1.0
    %v655 = vrcp.pop %v654
    %v656 = vmul.f32 %v654, %v655
    %v657 = vsub.f32 1.0, %v656
    %v658 = vmul.f32 %v655, %v657
    %v659 = vadd.f32 %v655, %v658
    %vm660 = vweird.f32 %v654
    %vm661 = vweird.f32 %v655
    %vm662 = vmor %vm660, %vm661
    %v663 = vsel %vm662, %v655, %v659
    %v664 = vand.u32 2147483647, %v654
    %vm665 = vcmp.eq.f32.partialorder %v664, 8.507059e+37
    %v666 = vand.u32 %v654, 2147483648
    %v667 = vor.u32 1.1754944e-38, %v666
    %v668 = vsel %vm665, %v667, %v663
    %v669 = vmul.f32 1.0, %v668
    %v670 = vmul.f32 %v649, %v627
    %v671 = vadd.f32 %v587, %v670
    %v672 = vtanh.pop %v671
    %v673 = vsub.f32 1.0, %v669
    %v674 = vmul.f32 %v673, %v672
    %v675 = vmul.f32 %v669, %v547
    %v676 = vadd.f32 %v674, %v675
    %v677 = vstv %s548
    %vm678 = vcmp.lt.s32.totalorder %v677, %v79
    %v679 = vsel %vm678, %v676, %v547
    %s680 = sadd.s32 %s81, 2
    %s681 = scalar_lea.vmem [#allocation3], 8
    %v682 = vld [vmem:[%s681] sm:$0xf]
    %683 = vmatpush.bf16.msra.mxu0 %v224
    %684 = vmatpush.bf16.msra.mxu0 %v221
    %685 = vmatpush.bf16.msra.mxu0 %v218
    %686 = vmatpush.bf16.msra.mxu0 %v215
    %687 = vmatpush.bf16.msra.mxu0 %v212
    %688 = vmatpush.bf16.msra.mxu0 %v209
    %689 = vmatpush.bf16.msra.mxu0 %v206
    %690 = vmatpush.bf16.msra.mxu0 %v203
    %691 = vmatmul.bf16.gmra.mxu0 %v682
    %v692 = vpop.f32.mrf.mxu0
    %v693 = vadd.f32 %v117, %v692
    %v694 = vpop.f32.mrf.mxu0
    %695 = vdwg.mxu0
    %696 = vmatpush.bf16.msra.mxu0 %v225
    %697 = vmatpush.bf16.msra.mxu0 %v222
    %698 = vmatpush.bf16.msra.mxu0 %v219
    %699 = vmatpush.bf16.msra.mxu0 %v216
    %700 = vmatpush.bf16.msra.mxu0 %v213
    %701 = vmatpush.bf16.msra.mxu0 %v210
    %702 = vmatpush.bf16.msra.mxu0 %v207
    %703 = vmatpush.bf16.msra.mxu0 %v204
    %704 = vmatmul.bf16.gmra.mxu0 %v682
    %v705 = vpop.f32.mrf.mxu0
    %v706 = vadd.f32 %v118, %v705
    %v707 = vpop.f32.mrf.mxu0
    %708 = vdwg.mxu0
    %709 = vmatpush.bf16.msra.mxu0 %v226
    %710 = vmatpush.bf16.msra.mxu0 %v223
    %711 = vmatpush.bf16.msra.mxu0 %v220
    %712 = vmatpush.bf16.msra.mxu0 %v217
    %713 = vmatpush.bf16.msra.mxu0 %v214
    %714 = vmatpush.bf16.msra.mxu0 %v211
    %715 = vmatpush.bf16.msra.mxu0 %v208
    %716 = vmatpush.bf16.msra.mxu0 %v205
    %717 = vmatmul.bf16.gmra.mxu0 %v682
    %v718 = vpop.f32.mrf.mxu0
    %v719 = vadd.f32 %v119, %v718
    %v720 = vpop.f32.mrf.mxu0
    %721 = vdwg.mxu0
    %v722 = vpack.c.bf16 %v679, %v679
    %723 = vmatpush.bf16.msra.mxu0 %v432
    %724 = vmatpush.bf16.msra.mxu0 %v429
    %725 = vmatpush.bf16.msra.mxu0 %v426
    %726 = vmatpush.bf16.msra.mxu0 %v423
    %727 = vmatpush.bf16.msra.mxu0 %v420
    %728 = vmatpush.bf16.msra.mxu0 %v417
    %729 = vmatpush.bf16.msra.mxu0 %v414
    %730 = vmatpush.bf16.msra.mxu0 %v411
    %731 = vmatmul.bf16.gmra.mxu0 %v722
    %v732 = vpop.f32.mrf.mxu0
    %v733 = vadd.f32 %v325, %v732
    %v734 = vpop.f32.mrf.mxu0
    %735 = vdwg.mxu0
    %736 = vmatpush.bf16.msra.mxu0 %v433
    %737 = vmatpush.bf16.msra.mxu0 %v430
    %738 = vmatpush.bf16.msra.mxu0 %v427
    %739 = vmatpush.bf16.msra.mxu0 %v424
    %740 = vmatpush.bf16.msra.mxu0 %v421
    %741 = vmatpush.bf16.msra.mxu0 %v418
    %742 = vmatpush.bf16.msra.mxu0 %v415
    %743 = vmatpush.bf16.msra.mxu0 %v412
    %744 = vmatmul.bf16.gmra.mxu0 %v722
    %v745 = vpop.f32.mrf.mxu0
    %v746 = vadd.f32 %v326, %v745
    %v747 = vpop.f32.mrf.mxu0
    %748 = vdwg.mxu0
    %749 = vmatpush.bf16.msra.mxu0 %v434
    %750 = vmatpush.bf16.msra.mxu0 %v431
    %751 = vmatpush.bf16.msra.mxu0 %v428
    %752 = vmatpush.bf16.msra.mxu0 %v425
    %753 = vmatpush.bf16.msra.mxu0 %v422
    %754 = vmatpush.bf16.msra.mxu0 %v419
    %755 = vmatpush.bf16.msra.mxu0 %v416
    %756 = vmatpush.bf16.msra.mxu0 %v413
    %757 = vmatmul.bf16.gmra.mxu0 %v722
    %v758 = vpop.f32.mrf.mxu0
    %v759 = vadd.f32 %v327, %v758
    %v760 = vpop.f32.mrf.mxu0
    %761 = vdwg.mxu0
    %v762 = vadd.f32 %v693, %v733
    %v763 = vxor.u32 %v762, 2147483648
    %v764 = vmul.f32 %v763, 1.442695
    %v765 = vpow.pop %v764
    %v766 = vadd.f32 %v765, 1.0
    %v767 = vrcp.pop %v766
    %v768 = vmul.f32 %v766, %v767
    %v769 = vsub.f32 1.0, %v768
    %v770 = vmul.f32 %v767, %v769
    %v771 = vadd.f32 %v767, %v770
    %vm772 = vweird.f32 %v766
    %vm773 = vweird.f32 %v767
    %vm774 = vmor %vm772, %vm773
    %v775 = vsel %vm774, %v767, %v771
    %v776 = vand.u32 2147483647, %v766
    %vm777 = vcmp.eq.f32.partialorder %v776, 8.507059e+37
    %v778 = vand.u32 %v766, 2147483648
    %v779 = vor.u32 1.1754944e-38, %v778
    %v780 = vsel %vm777, %v779, %v775
    %v781 = vmul.f32 1.0, %v780
    %v782 = vadd.f32 %v706, %v746
    %v783 = vxor.u32 %v782, 2147483648
    %v784 = vmul.f32 %v783, 1.442695
    %v785 = vpow.pop %v784
    %v786 = vadd.f32 %v785, 1.0
    %v787 = vrcp.pop %v786
    %v788 = vmul.f32 %v786, %v787
    %v789 = vsub.f32 1.0, %v788
    %v790 = vmul.f32 %v787, %v789
    %v791 = vadd.f32 %v787, %v790
    %vm792 = vweird.f32 %v786
    %vm793 = vweird.f32 %v787
    %vm794 = vmor %vm792, %vm793
    %v795 = vsel %vm794, %v787, %v791
    %v796 = vand.u32 2147483647, %v786
    %vm797 = vcmp.eq.f32.partialorder %v796, 8.507059e+37
    %v798 = vand.u32 %v786, 2147483648
    %v799 = vor.u32 1.1754944e-38, %v798
    %v800 = vsel %vm797, %v799, %v795
    %v801 = vmul.f32 1.0, %v800
    %v802 = vmul.f32 %v781, %v759
    %v803 = vadd.f32 %v719, %v802
    %v804 = vtanh.pop %v803
    %v805 = vsub.f32 1.0, %v801
    %v806 = vmul.f32 %v805, %v804
    %v807 = vmul.f32 %v801, %v679
    %v808 = vadd.f32 %v806, %v807
    %v809 = vstv %s680
    %vm810 = vcmp.lt.s32.totalorder %v809, %v79
    %v811 = vsel %vm810, %v808, %v679
    %s812 = sadd.s32 %s81, 3
    %s813 = scalar_lea.vmem [#allocation3], 12
    %v814 = vld [vmem:[%s813] sm:$0xf]
    %815 = vmatpush.bf16.msra.mxu0 %v224
    %816 = vmatpush.bf16.msra.mxu0 %v221
    %817 = vmatpush.bf16.msra.mxu0 %v218
    %818 = vmatpush.bf16.msra.mxu0 %v215
    %819 = vmatpush.bf16.msra.mxu0 %v212
    %820 = vmatpush.bf16.msra.mxu0 %v209
    %821 = vmatpush.bf16.msra.mxu0 %v206
    %822 = vmatpush.bf16.msra.mxu0 %v203
    %823 = vmatmul.bf16.gmra.mxu0 %v814
    %v824 = vpop.f32.mrf.mxu0
    %v825 = vadd.f32 %v117, %v824
    %v826 = vpop.f32.mrf.mxu0
    %827 = vdwg.mxu0
    %828 = vmatpush.bf16.msra.mxu0 %v225
    %829 = vmatpush.bf16.msra.mxu0 %v222
    %830 = vmatpush.bf16.msra.mxu0 %v219
    %831 = vmatpush.bf16.msra.mxu0 %v216
    %832 = vmatpush.bf16.msra.mxu0 %v213
    %833 = vmatpush.bf16.msra.mxu0 %v210
    %834 = vmatpush.bf16.msra.mxu0 %v207
    %835 = vmatpush.bf16.msra.mxu0 %v204
    %836 = vmatmul.bf16.gmra.mxu0 %v814
    %v837 = vpop.f32.mrf.mxu0
    %v838 = vadd.f32 %v118, %v837
    %v839 = vpop.f32.mrf.mxu0
    %840 = vdwg.mxu0
    %841 = vmatpush.bf16.msra.mxu0 %v226
    %842 = vmatpush.bf16.msra.mxu0 %v223
    %843 = vmatpush.bf16.msra.mxu0 %v220
    %844 = vmatpush.bf16.msra.mxu0 %v217
    %845 = vmatpush.bf16.msra.mxu0 %v214
    %846 = vmatpush.bf16.msra.mxu0 %v211
    %847 = vmatpush.bf16.msra.mxu0 %v208
    %848 = vmatpush.bf16.msra.mxu0 %v205
    %849 = vmatmul.bf16.gmra.mxu0 %v814
    %v850 = vpop.f32.mrf.mxu0
    %v851 = vadd.f32 %v119, %v850
    %v852 = vpop.f32.mrf.mxu0
    %853 = vdwg.mxu0
    %v854 = vpack.c.bf16 %v811, %v811
    %855 = vmatpush.bf16.msra.mxu0 %v432
    %856 = vmatpush.bf16.msra.mxu0 %v429
    %857 = vmatpush.bf16.msra.mxu0 %v426
    %858 = vmatpush.bf16.msra.mxu0 %v423
    %859 = vmatpush.bf16.msra.mxu0 %v420
    %860 = vmatpush.bf16.msra.mxu0 %v417
    %861 = vmatpush.bf16.msra.mxu0 %v414
    %862 = vmatpush.bf16.msra.mxu0 %v411
    %863 = vmatmul.bf16.gmra.mxu0 %v854
    %v864 = vpop.f32.mrf.mxu0
    %v865 = vadd.f32 %v325, %v864
    %v866 = vpop.f32.mrf.mxu0
    %867 = vdwg.mxu0
    %868 = vmatpush.bf16.msra.mxu0 %v433
    %869 = vmatpush.bf16.msra.mxu0 %v430
    %870 = vmatpush.bf16.msra.mxu0 %v427
    %871 = vmatpush.bf16.msra.mxu0 %v424
    %872 = vmatpush.bf16.msra.mxu0 %v421
    %873 = vmatpush.bf16.msra.mxu0 %v418
    %874 = vmatpush.bf16.msra.mxu0 %v415
    %875 = vmatpush.bf16.msra.mxu0 %v412
    %876 = vmatmul.bf16.gmra.mxu0 %v854
    %v877 = vpop.f32.mrf.mxu0
    %v878 = vadd.f32 %v326, %v877
    %v879 = vpop.f32.mrf.mxu0
    %880 = vdwg.mxu0
    %881 = vmatpush.bf16.msra.mxu0 %v434
    %882 = vmatpush.bf16.msra.mxu0 %v431
    %883 = vmatpush.bf16.msra.mxu0 %v428
    %884 = vmatpush.bf16.msra.mxu0 %v425
    %885 = vmatpush.bf16.msra.mxu0 %v422
    %886 = vmatpush.bf16.msra.mxu0 %v419
    %887 = vmatpush.bf16.msra.mxu0 %v416
    %888 = vmatpush.bf16.msra.mxu0 %v413
    %889 = vmatmul.bf16.gmra.mxu0 %v854
    %v890 = vpop.f32.mrf.mxu0
    %v891 = vadd.f32 %v327, %v890
    %v892 = vpop.f32.mrf.mxu0
    %893 = vdwg.mxu0
    %v894 = vadd.f32 %v825, %v865
    %v895 = vxor.u32 %v894, 2147483648
    %v896 = vmul.f32 %v895, 1.442695
    %v897 = vpow.pop %v896
    %v898 = vadd.f32 %v897, 1.0
    %v899 = vrcp.pop %v898
    %v900 = vmul.f32 %v898, %v899
    %v901 = vsub.f32 1.0, %v900
    %v902 = vmul.f32 %v899, %v901
    %v903 = vadd.f32 %v899, %v902
    %vm904 = vweird.f32 %v898
    %vm905 = vweird.f32 %v899
    %vm906 = vmor %vm904, %vm905
    %v907 = vsel %vm906, %v899, %v903
    %v908 = vand.u32 2147483647, %v898
    %vm909 = vcmp.eq.f32.partialorder %v908, 8.507059e+37
    %v910 = vand.u32 %v898, 2147483648
    %v911 = vor.u32 1.1754944e-38, %v910
    %v912 = vsel %vm909, %v911, %v907
    %v913 = vmul.f32 1.0, %v912
    %v914 = vadd.f32 %v838, %v878
    %v915 = vxor.u32 %v914, 2147483648
    %v916 = vmul.f32 %v915, 1.442695
    %v917 = vpow.pop %v916
    %v918 = vadd.f32 %v917, 1.0
    %v919 = vrcp.pop %v918
    %v920 = vmul.f32 %v918, %v919
    %v921 = vsub.f32 1.0, %v920
    %v922 = vmul.f32 %v919, %v921
    %v923 = vadd.f32 %v919, %v922
    %vm924 = vweird.f32 %v918
    %vm925 = vweird.f32 %v919
    %vm926 = vmor %vm924, %vm925
    %v927 = vsel %vm926, %v919, %v923
    %v928 = vand.u32 2147483647, %v918
    %vm929 = vcmp.eq.f32.partialorder %v928, 8.507059e+37
    %v930 = vand.u32 %v918, 2147483648
    %v931 = vor.u32 1.1754944e-38, %v930
    %v932 = vsel %vm929, %v931, %v927
    %v933 = vmul.f32 1.0, %v932
    %v934 = vmul.f32 %v913, %v891
    %v935 = vadd.f32 %v851, %v934
    %v936 = vtanh.pop %v935
    %v937 = vsub.f32 1.0, %v933
    %v938 = vmul.f32 %v937, %v936
    %v939 = vmul.f32 %v933, %v811
    %v940 = vadd.f32 %v938, %v939
    %v941 = vstv %s812
    %vm942 = vcmp.lt.s32.totalorder %v941, %v79
    %v943 = vsel %vm942, %v940, %v811
    %s944 = sadd.s32 %s81, 4
    %s945 = scalar_lea.vmem [#allocation3], 16
    %v946 = vld [vmem:[%s945] sm:$0xf]
    %947 = vmatpush.bf16.msra.mxu0 %v224
    %948 = vmatpush.bf16.msra.mxu0 %v221
    %949 = vmatpush.bf16.msra.mxu0 %v218
    %950 = vmatpush.bf16.msra.mxu0 %v215
    %951 = vmatpush.bf16.msra.mxu0 %v212
    %952 = vmatpush.bf16.msra.mxu0 %v209
    %953 = vmatpush.bf16.msra.mxu0 %v206
    %954 = vmatpush.bf16.msra.mxu0 %v203
    %955 = vmatmul.bf16.gmra.mxu0 %v946
    %v956 = vpop.f32.mrf.mxu0
    %v957 = vadd.f32 %v117, %v956
    %v958 = vpop.f32.mrf.mxu0
    %959 = vdwg.mxu0
    %960 = vmatpush.bf16.msra.mxu0 %v225
    %961 = vmatpush.bf16.msra.mxu0 %v222
    %962 = vmatpush.bf16.msra.mxu0 %v219
    %963 = vmatpush.bf16.msra.mxu0 %v216
    %964 = vmatpush.bf16.msra.mxu0 %v213
    %965 = vmatpush.bf16.msra.mxu0 %v210
    %966 = vmatpush.bf16.msra.mxu0 %v207
    %967 = vmatpush.bf16.msra.mxu0 %v204
    %968 = vmatmul.bf16.gmra.mxu0 %v946
    %v969 = vpop.f32.mrf.mxu0
    %v970 = vadd.f32 %v118, %v969
    %v971 = vpop.f32.mrf.mxu0
    %972 = vdwg.mxu0
    %973 = vmatpush.bf16.msra.mxu0 %v226
    %974 = vmatpush.bf16.msra.mxu0 %v223
    %975 = vmatpush.bf16.msra.mxu0 %v220
    %976 = vmatpush.bf16.msra.mxu0 %v217
    %977 = vmatpush.bf16.msra.mxu0 %v214
    %978 = vmatpush.bf16.msra.mxu0 %v211
    %979 = vmatpush.bf16.msra.mxu0 %v208
    %980 = vmatpush.bf16.msra.mxu0 %v205
    %981 = vmatmul.bf16.gmra.mxu0 %v946
    %v982 = vpop.f32.mrf.mxu0
    %v983 = vadd.f32 %v119, %v982
    %v984 = vpop.f32.mrf.mxu0
    %985 = vdwg.mxu0
    %v986 = vpack.c.bf16 %v943, %v943
    %987 = vmatpush.bf16.msra.mxu0 %v432
    %988 = vmatpush.bf16.msra.mxu0 %v429
    %989 = vmatpush.bf16.msra.mxu0 %v426
    %990 = vmatpush.bf16.msra.mxu0 %v423
    %991 = vmatpush.bf16.msra.mxu0 %v420
    %992 = vmatpush.bf16.msra.mxu0 %v417
    %993 = vmatpush.bf16.msra.mxu0 %v414
    %994 = vmatpush.bf16.msra.mxu0 %v411
    %995 = vmatmul.bf16.gmra.mxu0 %v986
    %v996 = vpop.f32.mrf.mxu0
    %v997 = vadd.f32 %v325, %v996
    %v998 = vpop.f32.mrf.mxu0
    %999 = vdwg.mxu0
    %1000 = vmatpush.bf16.msra.mxu0 %v433
    %1001 = vmatpush.bf16.msra.mxu0 %v430
    %1002 = vmatpush.bf16.msra.mxu0 %v427
    %1003 = vmatpush.bf16.msra.mxu0 %v424
    %1004 = vmatpush.bf16.msra.mxu0 %v421
    %1005 = vmatpush.bf16.msra.mxu0 %v418
    %1006 = vmatpush.bf16.msra.mxu0 %v415
    %1007 = vmatpush.bf16.msra.mxu0 %v412
    %1008 = vmatmul.bf16.gmra.mxu0 %v986
    %v1009 = vpop.f32.mrf.mxu0
    %v1010 = vadd.f32 %v326, %v1009
    %v1011 = vpop.f32.mrf.mxu0
    %1012 = vdwg.mxu0
    %1013 = vmatpush.bf16.msra.mxu0 %v434
    %1014 = vmatpush.bf16.msra.mxu0 %v431
    %1015 = vmatpush.bf16.msra.mxu0 %v428
    %1016 = vmatpush.bf16.msra.mxu0 %v425
    %1017 = vmatpush.bf16.msra.mxu0 %v422
    %1018 = vmatpush.bf16.msra.mxu0 %v419
    %1019 = vmatpush.bf16.msra.mxu0 %v416
    %1020 = vmatpush.bf16.msra.mxu0 %v413
    %1021 = vmatmul.bf16.gmra.mxu0 %v986
    %v1022 = vpop.f32.mrf.mxu0
    %v1023 = vadd.f32 %v327, %v1022
    %v1024 = vpop.f32.mrf.mxu0
    %1025 = vdwg.mxu0
    %v1026 = vadd.f32 %v957, %v997
    %v1027 = vxor.u32 %v1026, 2147483648
    %v1028 = vmul.f32 %v1027, 1.442695
    %v1029 = vpow.pop %v1028
    %v1030 = vadd.f32 %v1029, 1.0
    %v1031 = vrcp.pop %v1030
    %v1032 = vmul.f32 %v1030, %v1031
    %v1033 = vsub.f32 1.0, %v1032
    %v1034 = vmul.f32 %v1031, %v1033
    %v1035 = vadd.f32 %v1031, %v1034
    %vm1036 = vweird.f32 %v1030
    %vm1037 = vweird.f32 %v1031
    %vm1038 = vmor %vm1036, %vm1037
    %v1039 = vsel %vm1038, %v1031, %v1035
    %v1040 = vand.u32 2147483647, %v1030
    %vm1041 = vcmp.eq.f32.partialorder %v1040, 8.507059e+37
    %v1042 = vand.u32 %v1030, 2147483648
    %v1043 = vor.u32 1.1754944e-38, %v1042
    %v1044 = vsel %vm1041, %v1043, %v1039
    %v1045 = vmul.f32 1.0, %v1044
    %v1046 = vadd.f32 %v970, %v1010
    %v1047 = vxor.u32 %v1046, 2147483648
    %v1048 = vmul.f32 %v1047, 1.442695
    %v1049 = vpow.pop %v1048
    %v1050 = vadd.f32 %v1049, 1.0
    %v1051 = vrcp.pop %v1050
    %v1052 = vmul.f32 %v1050, %v1051
    %v1053 = vsub.f32 1.0, %v1052
    %v1054 = vmul.f32 %v1051, %v1053
    %v1055 = vadd.f32 %v1051, %v1054
    %vm1056 = vweird.f32 %v1050
    %vm1057 = vweird.f32 %v1051
    %vm1058 = vmor %vm1056, %vm1057
    %v1059 = vsel %vm1058, %v1051, %v1055
    %v1060 = vand.u32 2147483647, %v1050
    %vm1061 = vcmp.eq.f32.partialorder %v1060, 8.507059e+37
    %v1062 = vand.u32 %v1050, 2147483648
    %v1063 = vor.u32 1.1754944e-38, %v1062
    %v1064 = vsel %vm1061, %v1063, %v1059
    %v1065 = vmul.f32 1.0, %v1064
    %v1066 = vmul.f32 %v1045, %v1023
    %v1067 = vadd.f32 %v983, %v1066
    %v1068 = vtanh.pop %v1067
    %v1069 = vsub.f32 1.0, %v1065
    %v1070 = vmul.f32 %v1069, %v1068
    %v1071 = vmul.f32 %v1065, %v943
    %v1072 = vadd.f32 %v1070, %v1071
    %v1073 = vstv %s944
    %vm1074 = vcmp.lt.s32.totalorder %v1073, %v79
    %v1075 = vsel %vm1074, %v1072, %v943
    %s1076 = sadd.s32 %s81, 5
    %s1077 = scalar_lea.vmem [#allocation3], 20
    %v1078 = vld [vmem:[%s1077] sm:$0xf]
    %1079 = vmatpush.bf16.msra.mxu0 %v224
    %1080 = vmatpush.bf16.msra.mxu0 %v221
    %1081 = vmatpush.bf16.msra.mxu0 %v218
    %1082 = vmatpush.bf16.msra.mxu0 %v215
    %1083 = vmatpush.bf16.msra.mxu0 %v212
    %1084 = vmatpush.bf16.msra.mxu0 %v209
    %1085 = vmatpush.bf16.msra.mxu0 %v206
    %1086 = vmatpush.bf16.msra.mxu0 %v203
    %1087 = vmatmul.bf16.gmra.mxu0 %v1078
    %v1088 = vpop.f32.mrf.mxu0
    %v1089 = vadd.f32 %v117, %v1088
    %v1090 = vpop.f32.mrf.mxu0
    %1091 = vdwg.mxu0
    %1092 = vmatpush.bf16.msra.mxu0 %v225
    %1093 = vmatpush.bf16.msra.mxu0 %v222
    %1094 = vmatpush.bf16.msra.mxu0 %v219
    %1095 = vmatpush.bf16.msra.mxu0 %v216
    %1096 = vmatpush.bf16.msra.mxu0 %v213
    %1097 = vmatpush.bf16.msra.mxu0 %v210
    %1098 = vmatpush.bf16.msra.mxu0 %v207
    %1099 = vmatpush.bf16.msra.mxu0 %v204
    %1100 = vmatmul.bf16.gmra.mxu0 %v1078
    %v1101 = vpop.f32.mrf.mxu0
    %v1102 = vadd.f32 %v118, %v1101
    %v1103 = vpop.f32.mrf.mxu0
    %1104 = vdwg.mxu0
    %1105 = vmatpush.bf16.msra.mxu0 %v226
    %1106 = vmatpush.bf16.msra.mxu0 %v223
    %1107 = vmatpush.bf16.msra.mxu0 %v220
    %1108 = vmatpush.bf16.msra.mxu0 %v217
    %1109 = vmatpush.bf16.msra.mxu0 %v214
    %1110 = vmatpush.bf16.msra.mxu0 %v211
    %1111 = vmatpush.bf16.msra.mxu0 %v208
    %1112 = vmatpush.bf16.msra.mxu0 %v205
    %1113 = vmatmul.bf16.gmra.mxu0 %v1078
    %v1114 = vpop.f32.mrf.mxu0
    %v1115 = vadd.f32 %v119, %v1114
    %v1116 = vpop.f32.mrf.mxu0
    %1117 = vdwg.mxu0
    %v1118 = vpack.c.bf16 %v1075, %v1075
    %1119 = vmatpush.bf16.msra.mxu0 %v432
    %1120 = vmatpush.bf16.msra.mxu0 %v429
    %1121 = vmatpush.bf16.msra.mxu0 %v426
    %1122 = vmatpush.bf16.msra.mxu0 %v423
    %1123 = vmatpush.bf16.msra.mxu0 %v420
    %1124 = vmatpush.bf16.msra.mxu0 %v417
    %1125 = vmatpush.bf16.msra.mxu0 %v414
    %1126 = vmatpush.bf16.msra.mxu0 %v411
    %1127 = vmatmul.bf16.gmra.mxu0 %v1118
    %v1128 = vpop.f32.mrf.mxu0
    %v1129 = vadd.f32 %v325, %v1128
    %v1130 = vpop.f32.mrf.mxu0
    %1131 = vdwg.mxu0
    %1132 = vmatpush.bf16.msra.mxu0 %v433
    %1133 = vmatpush.bf16.msra.mxu0 %v430
    %1134 = vmatpush.bf16.msra.mxu0 %v427
    %1135 = vmatpush.bf16.msra.mxu0 %v424
    %1136 = vmatpush.bf16.msra.mxu0 %v421
    %1137 = vmatpush.bf16.msra.mxu0 %v418
    %1138 = vmatpush.bf16.msra.mxu0 %v415
    %1139 = vmatpush.bf16.msra.mxu0 %v412
    %1140 = vmatmul.bf16.gmra.mxu0 %v1118
    %v1141 = vpop.f32.mrf.mxu0
    %v1142 = vadd.f32 %v326, %v1141
    %v1143 = vpop.f32.mrf.mxu0
    %1144 = vdwg.mxu0
    %1145 = vmatpush.bf16.msra.mxu0 %v434
    %1146 = vmatpush.bf16.msra.mxu0 %v431
    %1147 = vmatpush.bf16.msra.mxu0 %v428
    %1148 = vmatpush.bf16.msra.mxu0 %v425
    %1149 = vmatpush.bf16.msra.mxu0 %v422
    %1150 = vmatpush.bf16.msra.mxu0 %v419
    %1151 = vmatpush.bf16.msra.mxu0 %v416
    %1152 = vmatpush.bf16.msra.mxu0 %v413
    %1153 = vmatmul.bf16.gmra.mxu0 %v1118
    %v1154 = vpop.f32.mrf.mxu0
    %v1155 = vadd.f32 %v327, %v1154
    %v1156 = vpop.f32.mrf.mxu0
    %1157 = vdwg.mxu0
    %v1158 = vadd.f32 %v1089, %v1129
    %v1159 = vxor.u32 %v1158, 2147483648
    %v1160 = vmul.f32 %v1159, 1.442695
    %v1161 = vpow.pop %v1160
    %v1162 = vadd.f32 %v1161, 1.0
    %v1163 = vrcp.pop %v1162
    %v1164 = vmul.f32 %v1162, %v1163
    %v1165 = vsub.f32 1.0, %v1164
    %v1166 = vmul.f32 %v1163, %v1165
    %v1167 = vadd.f32 %v1163, %v1166
    %vm1168 = vweird.f32 %v1162
    %vm1169 = vweird.f32 %v1163
    %vm1170 = vmor %vm1168, %vm1169
    %v1171 = vsel %vm1170, %v1163, %v1167
    %v1172 = vand.u32 2147483647, %v1162
    %vm1173 = vcmp.eq.f32.partialorder %v1172, 8.507059e+37
    %v1174 = vand.u32 %v1162, 2147483648
    %v1175 = vor.u32 1.1754944e-38, %v1174
    %v1176 = vsel %vm1173, %v1175, %v1171
    %v1177 = vmul.f32 1.0, %v1176
    %v1178 = vadd.f32 %v1102, %v1142
    %v1179 = vxor.u32 %v1178, 2147483648
    %v1180 = vmul.f32 %v1179, 1.442695
    %v1181 = vpow.pop %v1180
    %v1182 = vadd.f32 %v1181, 1.0
    %v1183 = vrcp.pop %v1182
    %v1184 = vmul.f32 %v1182, %v1183
    %v1185 = vsub.f32 1.0, %v1184
    %v1186 = vmul.f32 %v1183, %v1185
    %v1187 = vadd.f32 %v1183, %v1186
    %vm1188 = vweird.f32 %v1182
    %vm1189 = vweird.f32 %v1183
    %vm1190 = vmor %vm1188, %vm1189
    %v1191 = vsel %vm1190, %v1183, %v1187
    %v1192 = vand.u32 2147483647, %v1182
    %vm1193 = vcmp.eq.f32.partialorder %v1192, 8.507059e+37
    %v1194 = vand.u32 %v1182, 2147483648
    %v1195 = vor.u32 1.1754944e-38, %v1194
    %v1196 = vsel %vm1193, %v1195, %v1191
    %v1197 = vmul.f32 1.0, %v1196
    %v1198 = vmul.f32 %v1177, %v1155
    %v1199 = vadd.f32 %v1115, %v1198
    %v1200 = vtanh.pop %v1199
    %v1201 = vsub.f32 1.0, %v1197
    %v1202 = vmul.f32 %v1201, %v1200
    %v1203 = vmul.f32 %v1197, %v1075
    %v1204 = vadd.f32 %v1202, %v1203
    %v1205 = vstv %s1076
    %vm1206 = vcmp.lt.s32.totalorder %v1205, %v79
    %v1207 = vsel %vm1206, %v1204, %v1075
    %s1208 = sadd.s32 %s81, 6
    %s1209 = scalar_lea.vmem [#allocation3], 24
    %v1210 = vld [vmem:[%s1209] sm:$0xf]
    %1211 = vmatpush.bf16.msra.mxu0 %v224
    %1212 = vmatpush.bf16.msra.mxu0 %v221
    %1213 = vmatpush.bf16.msra.mxu0 %v218
    %1214 = vmatpush.bf16.msra.mxu0 %v215
    %1215 = vmatpush.bf16.msra.mxu0 %v212
    %1216 = vmatpush.bf16.msra.mxu0 %v209
    %1217 = vmatpush.bf16.msra.mxu0 %v206
    %1218 = vmatpush.bf16.msra.mxu0 %v203
    %1219 = vmatmul.bf16.gmra.mxu0 %v1210
    %v1220 = vpop.f32.mrf.mxu0
    %v1221 = vadd.f32 %v117, %v1220
    %v1222 = vpop.f32.mrf.mxu0
    %1223 = vdwg.mxu0
    %1224 = vmatpush.bf16.msra.mxu0 %v225
    %1225 = vmatpush.bf16.msra.mxu0 %v222
    %1226 = vmatpush.bf16.msra.mxu0 %v219
    %1227 = vmatpush.bf16.msra.mxu0 %v216
    %1228 = vmatpush.bf16.msra.mxu0 %v213
    %1229 = vmatpush.bf16.msra.mxu0 %v210
    %1230 = vmatpush.bf16.msra.mxu0 %v207
    %1231 = vmatpush.bf16.msra.mxu0 %v204
    %1232 = vmatmul.bf16.gmra.mxu0 %v1210
    %v1233 = vpop.f32.mrf.mxu0
    %v1234 = vadd.f32 %v118, %v1233
    %v1235 = vpop.f32.mrf.mxu0
    %1236 = vdwg.mxu0
    %1237 = vmatpush.bf16.msra.mxu0 %v226
    %1238 = vmatpush.bf16.msra.mxu0 %v223
    %1239 = vmatpush.bf16.msra.mxu0 %v220
    %1240 = vmatpush.bf16.msra.mxu0 %v217
    %1241 = vmatpush.bf16.msra.mxu0 %v214
    %1242 = vmatpush.bf16.msra.mxu0 %v211
    %1243 = vmatpush.bf16.msra.mxu0 %v208
    %1244 = vmatpush.bf16.msra.mxu0 %v205
    %1245 = vmatmul.bf16.gmra.mxu0 %v1210
    %v1246 = vpop.f32.mrf.mxu0
    %v1247 = vadd.f32 %v119, %v1246
    %v1248 = vpop.f32.mrf.mxu0
    %1249 = vdwg.mxu0
    %v1250 = vpack.c.bf16 %v1207, %v1207
    %1251 = vmatpush.bf16.msra.mxu0 %v432
    %1252 = vmatpush.bf16.msra.mxu0 %v429
    %1253 = vmatpush.bf16.msra.mxu0 %v426
    %1254 = vmatpush.bf16.msra.mxu0 %v423
    %1255 = vmatpush.bf16.msra.mxu0 %v420
    %1256 = vmatpush.bf16.msra.mxu0 %v417
    %1257 = vmatpush.bf16.msra.mxu0 %v414
    %1258 = vmatpush.bf16.msra.mxu0 %v411
    %1259 = vmatmul.bf16.gmra.mxu0 %v1250
    %v1260 = vpop.f32.mrf.mxu0
    %v1261 = vadd.f32 %v325, %v1260
    %v1262 = vpop.f32.mrf.mxu0
    %1263 = vdwg.mxu0
    %1264 = vmatpush.bf16.msra.mxu0 %v433
    %1265 = vmatpush.bf16.msra.mxu0 %v430
    %1266 = vmatpush.bf16.msra.mxu0 %v427
    %1267 = vmatpush.bf16.msra.mxu0 %v424
    %1268 = vmatpush.bf16.msra.mxu0 %v421
    %1269 = vmatpush.bf16.msra.mxu0 %v418
    %1270 = vmatpush.bf16.msra.mxu0 %v415
    %1271 = vmatpush.bf16.msra.mxu0 %v412
    %1272 = vmatmul.bf16.gmra.mxu0 %v1250
    %v1273 = vpop.f32.mrf.mxu0
    %v1274 = vadd.f32 %v326, %v1273
    %v1275 = vpop.f32.mrf.mxu0
    %1276 = vdwg.mxu0
    %1277 = vmatpush.bf16.msra.mxu0 %v434
    %1278 = vmatpush.bf16.msra.mxu0 %v431
    %1279 = vmatpush.bf16.msra.mxu0 %v428
    %1280 = vmatpush.bf16.msra.mxu0 %v425
    %1281 = vmatpush.bf16.msra.mxu0 %v422
    %1282 = vmatpush.bf16.msra.mxu0 %v419
    %1283 = vmatpush.bf16.msra.mxu0 %v416
    %1284 = vmatpush.bf16.msra.mxu0 %v413
    %1285 = vmatmul.bf16.gmra.mxu0 %v1250
    %v1286 = vpop.f32.mrf.mxu0
    %v1287 = vadd.f32 %v327, %v1286
    %v1288 = vpop.f32.mrf.mxu0
    %1289 = vdwg.mxu0
    %v1290 = vadd.f32 %v1221, %v1261
    %v1291 = vxor.u32 %v1290, 2147483648
    %v1292 = vmul.f32 %v1291, 1.442695
    %v1293 = vpow.pop %v1292
    %v1294 = vadd.f32 %v1293, 1.0
    %v1295 = vrcp.pop %v1294
    %v1296 = vmul.f32 %v1294, %v1295
    %v1297 = vsub.f32 1.0, %v1296
    %v1298 = vmul.f32 %v1295, %v1297
    %v1299 = vadd.f32 %v1295, %v1298
    %vm1300 = vweird.f32 %v1294
    %vm1301 = vweird.f32 %v1295
    %vm1302 = vmor %vm1300, %vm1301
    %v1303 = vsel %vm1302, %v1295, %v1299
    %v1304 = vand.u32 2147483647, %v1294
    %vm1305 = vcmp.eq.f32.partialorder %v1304, 8.507059e+37
    %v1306 = vand.u32 %v1294, 2147483648
    %v1307 = vor.u32 1.1754944e-38, %v1306
    %v1308 = vsel %vm1305, %v1307, %v1303
    %v1309 = vmul.f32 1.0, %v1308
    %v1310 = vadd.f32 %v1234, %v1274
    %v1311 = vxor.u32 %v1310, 2147483648
    %v1312 = vmul.f32 %v1311, 1.442695
    %v1313 = vpow.pop %v1312
    %v1314 = vadd.f32 %v1313, 1.0
    %v1315 = vrcp.pop %v1314
    %v1316 = vmul.f32 %v1314, %v1315
    %v1317 = vsub.f32 1.0, %v1316
    %v1318 = vmul.f32 %v1315, %v1317
    %v1319 = vadd.f32 %v1315, %v1318
    %vm1320 = vweird.f32 %v1314
    %vm1321 = vweird.f32 %v1315
    %vm1322 = vmor %vm1320, %vm1321
    %v1323 = vsel %vm1322, %v1315, %v1319
    %v1324 = vand.u32 2147483647, %v1314
    %vm1325 = vcmp.eq.f32.partialorder %v1324, 8.507059e+37
    %v1326 = vand.u32 %v1314, 2147483648
    %v1327 = vor.u32 1.1754944e-38, %v1326
    %v1328 = vsel %vm1325, %v1327, %v1323
    %v1329 = vmul.f32 1.0, %v1328
    %v1330 = vmul.f32 %v1309, %v1287
    %v1331 = vadd.f32 %v1247, %v1330
    %v1332 = vtanh.pop %v1331
    %v1333 = vsub.f32 1.0, %v1329
    %v1334 = vmul.f32 %v1333, %v1332
    %v1335 = vmul.f32 %v1329, %v1207
    %v1336 = vadd.f32 %v1334, %v1335
    %v1337 = vstv %s1208
    %vm1338 = vcmp.lt.s32.totalorder %v1337, %v79
    %v1339 = vsel %vm1338, %v1336, %v1207
    %s1340 = sadd.s32 %s81, 7
    %s1341 = scalar_lea.vmem [#allocation3], 28
    %v1342 = vld [vmem:[%s1341] sm:$0xf]
    %1343 = vmatpush.bf16.msra.mxu0 %v224
    %1344 = vmatpush.bf16.msra.mxu0 %v221
    %1345 = vmatpush.bf16.msra.mxu0 %v218
    %1346 = vmatpush.bf16.msra.mxu0 %v215
    %1347 = vmatpush.bf16.msra.mxu0 %v212
    %1348 = vmatpush.bf16.msra.mxu0 %v209
    %1349 = vmatpush.bf16.msra.mxu0 %v206
    %1350 = vmatpush.bf16.msra.mxu0 %v203
    %1351 = vmatmul.bf16.gmra.mxu0 %v1342
    %v1352 = vpop.f32.mrf.mxu0
    %v1353 = vadd.f32 %v117, %v1352
    %v1354 = vpop.f32.mrf.mxu0
    %1355 = vdwg.mxu0
    %1356 = vmatpush.bf16.msra.mxu0 %v225
    %1357 = vmatpush.bf16.msra.mxu0 %v222
    %1358 = vmatpush.bf16.msra.mxu0 %v219
    %1359 = vmatpush.bf16.msra.mxu0 %v216
    %1360 = vmatpush.bf16.msra.mxu0 %v213
    %1361 = vmatpush.bf16.msra.mxu0 %v210
    %1362 = vmatpush.bf16.msra.mxu0 %v207
    %1363 = vmatpush.bf16.msra.mxu0 %v204
    %1364 = vmatmul.bf16.gmra.mxu0 %v1342
    %v1365 = vpop.f32.mrf.mxu0
    %v1366 = vadd.f32 %v118, %v1365
    %v1367 = vpop.f32.mrf.mxu0
    %1368 = vdwg.mxu0
    %1369 = vmatpush.bf16.msra.mxu0 %v226
    %1370 = vmatpush.bf16.msra.mxu0 %v223
    %1371 = vmatpush.bf16.msra.mxu0 %v220
    %1372 = vmatpush.bf16.msra.mxu0 %v217
    %1373 = vmatpush.bf16.msra.mxu0 %v214
    %1374 = vmatpush.bf16.msra.mxu0 %v211
    %1375 = vmatpush.bf16.msra.mxu0 %v208
    %1376 = vmatpush.bf16.msra.mxu0 %v205
    %1377 = vmatmul.bf16.gmra.mxu0 %v1342
    %v1378 = vpop.f32.mrf.mxu0
    %v1379 = vadd.f32 %v119, %v1378
    %v1380 = vpop.f32.mrf.mxu0
    %1381 = vdwg.mxu0
    %v1382 = vpack.c.bf16 %v1339, %v1339
    %1383 = vmatpush.bf16.msra.mxu0 %v432
    %1384 = vmatpush.bf16.msra.mxu0 %v429
    %1385 = vmatpush.bf16.msra.mxu0 %v426
    %1386 = vmatpush.bf16.msra.mxu0 %v423
    %1387 = vmatpush.bf16.msra.mxu0 %v420
    %1388 = vmatpush.bf16.msra.mxu0 %v417
    %1389 = vmatpush.bf16.msra.mxu0 %v414
    %1390 = vmatpush.bf16.msra.mxu0 %v411
    %1391 = vmatmul.bf16.gmra.mxu0 %v1382
    %v1392 = vpop.f32.mrf.mxu0
    %v1393 = vadd.f32 %v325, %v1392
    %v1394 = vpop.f32.mrf.mxu0
    %1395 = vdwg.mxu0
    %1396 = vmatpush.bf16.msra.mxu0 %v433
    %1397 = vmatpush.bf16.msra.mxu0 %v430
    %1398 = vmatpush.bf16.msra.mxu0 %v427
    %1399 = vmatpush.bf16.msra.mxu0 %v424
    %1400 = vmatpush.bf16.msra.mxu0 %v421
    %1401 = vmatpush.bf16.msra.mxu0 %v418
    %1402 = vmatpush.bf16.msra.mxu0 %v415
    %1403 = vmatpush.bf16.msra.mxu0 %v412
    %1404 = vmatmul.bf16.gmra.mxu0 %v1382
    %v1405 = vpop.f32.mrf.mxu0
    %v1406 = vadd.f32 %v326, %v1405
    %v1407 = vpop.f32.mrf.mxu0
    %1408 = vdwg.mxu0
    %1409 = vmatpush.bf16.msra.mxu0 %v434
    %1410 = vmatpush.bf16.msra.mxu0 %v431
    %1411 = vmatpush.bf16.msra.mxu0 %v428
    %1412 = vmatpush.bf16.msra.mxu0 %v425
    %1413 = vmatpush.bf16.msra.mxu0 %v422
    %1414 = vmatpush.bf16.msra.mxu0 %v419
    %1415 = vmatpush.bf16.msra.mxu0 %v416
    %1416 = vmatpush.bf16.msra.mxu0 %v413
    %1417 = vmatmul.bf16.gmra.mxu0 %v1382
    %v1418 = vpop.f32.mrf.mxu0
    %v1419 = vadd.f32 %v327, %v1418
    %v1420 = vpop.f32.mrf.mxu0
    %1421 = vdwg.mxu0
    %v1422 = vadd.f32 %v1353, %v1393
    %v1423 = vxor.u32 %v1422, 2147483648
    %v1424 = vmul.f32 %v1423, 1.442695
    %v1425 = vpow.pop %v1424
    %v1426 = vadd.f32 %v1425, 1.0
    %v1427 = vrcp.pop %v1426
    %v1428 = vmul.f32 %v1426, %v1427
    %v1429 = vsub.f32 1.0, %v1428
    %v1430 = vmul.f32 %v1427, %v1429
    %v1431 = vadd.f32 %v1427, %v1430
    %vm1432 = vweird.f32 %v1426
    %vm1433 = vweird.f32 %v1427
    %vm1434 = vmor %vm1432, %vm1433
    %v1435 = vsel %vm1434, %v1427, %v1431
    %v1436 = vand.u32 2147483647, %v1426
    %vm1437 = vcmp.eq.f32.partialorder %v1436, 8.507059e+37
    %v1438 = vand.u32 %v1426, 2147483648
    %v1439 = vor.u32 1.1754944e-38, %v1438
    %v1440 = vsel %vm1437, %v1439, %v1435
    %v1441 = vmul.f32 1.0, %v1440
    %v1442 = vadd.f32 %v1366, %v1406
    %v1443 = vxor.u32 %v1442, 2147483648
    %v1444 = vmul.f32 %v1443, 1.442695
    %v1445 = vpow.pop %v1444
    %v1446 = vadd.f32 %v1445, 1.0
    %v1447 = vrcp.pop %v1446
    %v1448 = vmul.f32 %v1446, %v1447
    %v1449 = vsub.f32 1.0, %v1448
    %v1450 = vmul.f32 %v1447, %v1449
    %v1451 = vadd.f32 %v1447, %v1450
    %vm1452 = vweird.f32 %v1446
    %vm1453 = vweird.f32 %v1447
    %vm1454 = vmor %vm1452, %vm1453
    %v1455 = vsel %vm1454, %v1447, %v1451
    %v1456 = vand.u32 2147483647, %v1446
    %vm1457 = vcmp.eq.f32.partialorder %v1456, 8.507059e+37
    %v1458 = vand.u32 %v1446, 2147483648
    %v1459 = vor.u32 1.1754944e-38, %v1458
    %v1460 = vsel %vm1457, %v1459, %v1455
    %v1461 = vmul.f32 1.0, %v1460
    %v1462 = vmul.f32 %v1441, %v1419
    %v1463 = vadd.f32 %v1379, %v1462
    %v1464 = vtanh.pop %v1463
    %v1465 = vsub.f32 1.0, %v1461
    %v1466 = vmul.f32 %v1465, %v1464
    %v1467 = vmul.f32 %v1461, %v1339
    %v1468 = vadd.f32 %v1466, %v1467
    %v1469 = vstv %s1340
    %vm1470 = vcmp.lt.s32.totalorder %v1469, %v79
    %v1471 = vsel %vm1470, %v1468, %v1339
    %1472 = vst [vmem:[#allocation2] sm:$0xff] %v1471
    // Predicated region
    $region42: #{tpu_custom_call.1} parent=1 // pred_check
      %p1473 = pneg %p71
    $region43: #{tpu_custom_call.1} parent=1 // pred_check_branch
      %1475 = sbr.rel (%p1473) target = $region45
    $region44: #{tpu_custom_call.1} parent=1 // pred_region
      %1476 = vst [vmem:[#allocation9] sm:$0xff] %v1471
    $region45: #{tpu_custom_call.1} parent=1 // pred_fallthru
      _
    // Predicated region
    $region46: #{tpu_custom_call.1} parent=1 // pred_check
      _
    $region47: #{tpu_custom_call.1} parent=1 // pred_check_branch
      %1478 = sbr.rel (0) target = $region49
    $region48: #{tpu_custom_call.1} parent=1 // pred_region
      %1480 = vsyncadd [#allocation5], 0
      %s1482 = sshll.u32 [#allocation9], 4
      %s1483 = int_to_ptr.vmem [resolvable:$true] %s1482
      %s1484 = sshll.u32 %s6, 4
      %s1485 = int_to_ptr.hbm [resolvable:$true] %s1484
      %1487 = dma.vmem_to_hbm [thread:$0]  %s1483, 128, %s1485, [#allocation5]
    $region49: #{tpu_custom_call.1} parent=1 // pred_fallthru
      _
    // Predicated region
    $region50: #{tpu_custom_call.1} parent=1 // pred_check
      _
    $region51: #{tpu_custom_call.1} parent=1 // pred_check_branch
      %1489 = sbr.rel (0) target = $region53
    $region52: #{tpu_custom_call.1} parent=1 // pred_region
      %1491 = dma.done [#allocation5], 128
    $region53: #{tpu_custom_call.1} parent=1 // pred_fallthru
      _
    %1492 = vsyncpa [#allocation4], 1
    %1493 = vsyncpa [#allocation7], 1
    %1494 = vsyncpa [#allocation5], 1

</llo_original>
